<compile_context>
chip_gen: v5e
topology: v5e:2x2
jax: 0.10.0
libtpu: 0.0.40
codegen_flags: <defaults>
</compile_context>

<pallas_src>
import functools

import jax
import jax.numpy as jnp
from jax import lax
from jax.experimental import pallas as pl
from jax.experimental.pallas import tpu as pltpu


def _round_up(n, m):
    return ((n + m - 1) // m) * m


# -----------------------------------------------------------------------------
# Kernel 1: sequential GRU recurrence, TB timesteps per grid step
# -----------------------------------------------------------------------------
def _gru_recurrence_kernel(*refs, n_layers, tb, t_total):
    if n_layers > 1:
        (ig_ref, h0_ref, whh_ref, bhh_ref, wih_ref, bih_ref,
         hs_ref, hlast_ref) = refs
    else:
        ig_ref, h0_ref, whh_ref, bhh_ref, hs_ref, hlast_ref = refs
        wih_ref = bih_ref = None

    blk = pl.program_id(0)
    hp = hlast_ref.shape[-1]                      # padded hidden size
    wdt = whh_ref.dtype                           # matmul storage dtype (bf16)

    @pl.when(blk == 0)
    def _init():
        hlast_ref[...] = h0_ref[...]

    bhh = bhh_ref[...]                            # (1, 3Hp) f32
    bih = bih_ref[...] if n_layers > 1 else None  # (1, 3Hp) f32

    def gru_cell(igates, h):
        # One fused recurrent dot per step: (1,Hp) @ (Hp,3Hp), f32 MXU acc.
        hg = jnp.dot(h.astype(wdt), whh_ref[...],
                     preferred_element_type=jnp.float32) + bhh
        i_r = igates[:, 0 * hp:1 * hp]
        i_z = igates[:, 1 * hp:2 * hp]
        i_n = igates[:, 2 * hp:3 * hp]
        h_r = hg[:, 0 * hp:1 * hp]
        h_z = hg[:, 1 * hp:2 * hp]
        h_n = hg[:, 2 * hp:3 * hp]
        r = jax.nn.sigmoid(i_r + h_r)
        z = jax.nn.sigmoid(i_z + h_z)
        n = jnp.tanh(i_n + r * h_n)
        return (1.0 - z) * n + z * h

    needs_mask = (t_total % tb) != 0              # static

    def step(s, h):
        ig = ig_ref[pl.ds(s, 1), :]               # (1, 3Hp) precomputed input gates
        h_new = gru_cell(ig, h)
        if n_layers > 1:
            # PyTorch module re-applies the SAME GRU; its input is the previous
            # layer's output (== running hidden).  Requires E == H.
            for _ in range(n_layers - 1):
                ig_l = jnp.dot(h_new.astype(wdt), wih_ref[...],
                               preferred_element_type=jnp.float32) + bih
                h_new = gru_cell(ig_l, h_new)
        if needs_mask:                            # only for ragged T (pad steps)
            g = blk * tb + s
            keep = (g < t_total).astype(jnp.float32)
            h_new = keep * h_new + (1.0 - keep) * h
        hs_ref[pl.ds(s, 1), :] = h_new
        return h_new

    h_final = lax.fori_loop(0, tb, step, hlast_ref[...], unroll=True)
    hlast_ref[...] = h_final                      # carried to next grid block


# -----------------------------------------------------------------------------
# Kernel 2: batched output projection + log_softmax (parallel over T-tiles)
# -----------------------------------------------------------------------------
def _proj_logsoftmax_kernel(hs_ref, wout_ref, bout_ref, logp_ref):
    logits = jnp.dot(hs_ref[...].astype(wout_ref.dtype), wout_ref[...],
                     preferred_element_type=jnp.float32) + bout_ref[...]
    m = jnp.max(logits, axis=-1, keepdims=True)
    shifted = logits - m
    lse = jnp.log(jnp.sum(jnp.exp(shifted), axis=-1, keepdims=True))
    logp_ref[...] = shifted - lse


# -----------------------------------------------------------------------------
# Host-side weight preparation (transpose, fuse gates, lane-pad, bf16)
# -----------------------------------------------------------------------------
def prepare_decoder_params(params, weight_dtype=jnp.bfloat16, lane=128):
    V, E = params["embedding"].shape
    H = params["w_hh"].shape[1]
    O = params["w_out"].shape[0]
    Ep, Hp, Op = _round_up(E, lane), _round_up(H, lane), _round_up(O, lane)

    def fuse_pad_weight(w, rows, rows_p):
        # w: (3H, rows) PyTorch layout -> (rows_p, 3*Hp), gate order r,z,n,
        # each gate block zero-padded H -> Hp, rows zero-padded.
        w_t = w.T.reshape(rows, 3, H)
        w_t = jnp.pad(w_t, ((0, rows_p - rows), (0, 0), (0, Hp - H)))
        return w_t.reshape(rows_p, 3 * Hp).astype(weight_dtype)

    def fuse_pad_bias(b):
        b3 = jnp.pad(b.reshape(3, H), ((0, 0), (0, Hp - H)))
        return b3.reshape(1, 3 * Hp).astype(jnp.float32)

    emb = jnp.pad(params["embedding"], ((0, 0), (0, Ep - E))).astype(weight_dtype)
    w_out = jnp.pad(params["w_out"].T, ((0, Hp - H), (0, Op - O))).astype(weight_dtype)
    # Padded vocab columns get a very negative bias so they vanish in log_softmax.
    b_out = jnp.pad(params["b_out"].reshape(1, O).astype(jnp.float32),
                    ((0, 0), (0, Op - O)), constant_values=-1e30)

    return {
        "embedding": emb,                                        # (V, Ep)  bf16
        "w_ih": fuse_pad_weight(params["w_ih"], E, Ep),          # (Ep,3Hp) bf16
        "w_hh": fuse_pad_weight(params["w_hh"], H, Hp),          # (Hp,3Hp) bf16
        "b_ih": fuse_pad_bias(params["b_ih"]),                   # (1, 3Hp) f32
        "b_hh": fuse_pad_bias(params["b_hh"]),                   # (1, 3Hp) f32
        "w_out": w_out,                                          # (Hp, Op) bf16
        "b_out": b_out,                                          # (1, Op)  f32
        "dims": {"V": V, "E": E, "H": H, "O": O, "Ep": Ep, "Hp": Hp, "Op": Op},
    }


# -----------------------------------------------------------------------------
# Fused multi-step decode
# -----------------------------------------------------------------------------
def decoder_rnn_decode(token_ids, hidden0, prepared, *, n_layers=1, tb=8):
    d = prepared["dims"]
    E, H, O = d["E"], d["H"], d["O"]
    Ep, Hp, Op = d["Ep"], d["Hp"], d["Op"]

    T = int(token_ids.shape[0])
    assert T >= 1
    if n_layers > 1:
        assert E == H and Ep == Hp, "n_layers > 1 re-applies the same GRU (needs E == H)"

    nblk = pl.cdiv(T, tb)
    Tpad = nblk * tb
    token_ids = token_ids.astype(jnp.int32).reshape(T)

    # ---- Stage A (XLA): embedding gather + dense input-gate GEMM over all T ----
    x = jnp.take(prepared["embedding"], token_ids, axis=0)          # (T, Ep) bf16
    igates = jnp.dot(x, prepared["w_ih"],
                     preferred_element_type=jnp.float32) + prepared["b_ih"]
    igates = jnp.pad(igates, ((0, Tpad - T), (0, 0)))               # (Tpad, 3Hp) f32

    h0 = jnp.zeros((1, Hp), jnp.float32)
    h0 = h0.at[:, :H].set(hidden0.reshape(1, H).astype(jnp.float32))

    # ---- Stage B (Pallas): sequential recurrence, TB timesteps per grid step ----
    rec_kernel = functools.partial(_gru_recurrence_kernel,
                                   n_layers=n_layers, tb=tb, t_total=T)
    in_specs = [
        pl.BlockSpec((tb, 3 * Hp), lambda b: (b, 0)),               # igates block
        pl.BlockSpec((1, Hp), lambda b: (0, 0)),                    # h0 (resident)
        pl.BlockSpec((Hp, 3 * Hp), lambda b: (0, 0)),               # W_hh (resident)
        pl.BlockSpec((1, 3 * Hp), lambda b: (0, 0)),                # b_hh (resident)
    ]
    rec_args = [igates, h0, prepared["w_hh"], prepared["b_hh"]]
    if n_layers > 1:
        in_specs += [pl.BlockSpec((Ep, 3 * Hp), lambda b: (0, 0)),  # W_ih (resident)
                     pl.BlockSpec((1, 3 * Hp), lambda b: (0, 0))]   # b_ih (resident)
        rec_args += [prepared["w_ih"], prepared["b_ih"]]

    hs, h_last = pl.pallas_call(
        rec_kernel,
        grid_spec=pltpu.PrefetchScalarGridSpec(
            num_scalar_prefetch=0,
            grid=(nblk,),
            in_specs=in_specs,
            out_specs=(
                pl.BlockSpec((tb, Hp), lambda b: (b, 0)),           # all hidden states
                pl.BlockSpec((1, Hp), lambda b: (0, 0)),            # final hidden (resident)
            ),
        ),
        out_shape=(jax.ShapeDtypeStruct((Tpad, Hp), jnp.float32),
                   jax.ShapeDtypeStruct((1, Hp), jnp.float32)),
        compiler_params=pltpu.CompilerParams(
            dimension_semantics=("arbitrary",),                     # hidden carried
            vmem_limit_bytes=32 * 1024 * 1024),
    )(*rec_args)

    # ---- Stage C (Pallas): batched projection + log_softmax over all T ----
    logp = pl.pallas_call(
        _proj_logsoftmax_kernel,
        grid_spec=pltpu.PrefetchScalarGridSpec(
            num_scalar_prefetch=0,
            grid=(nblk,),
            in_specs=[
                pl.BlockSpec((tb, Hp), lambda b: (b, 0)),
                pl.BlockSpec((Hp, Op), lambda b: (0, 0)),
                pl.BlockSpec((1, Op), lambda b: (0, 0)),
            ],
            out_specs=pl.BlockSpec((tb, Op), lambda b: (b, 0)),
        ),
        out_shape=jax.ShapeDtypeStruct((Tpad, Op), jnp.float32),
        compiler_params=pltpu.CompilerParams(
            dimension_semantics=("parallel",),
            vmem_limit_bytes=32 * 1024 * 1024),
    )(hs, prepared["w_out"], prepared["b_out"])

    return logp[:T, :O], h_last[:, :H].reshape(1, 1, H)


def decoder_rnn_forward(token_id, hidden, prepared, *, n_layers=1, tb=8):
    """Single-step forward, mirroring DecoderRNN.forward(input, hidden)."""
    token_ids = jnp.asarray(token_id, jnp.int32).reshape(1)
    logp, h = decoder_rnn_decode(token_ids, hidden, prepared,
                                 n_layers=n_layers, tb=tb)
    return logp, h


# -----------------------------------------------------------------------------
# Pure-JAX reference (mirrors the prepared / padded / bf16 weights)
# -----------------------------------------------------------------------------
def _reference_decode(token_ids, hidden0, prepared, *, n_layers=1):
    d = prepared["dims"]
    H, O, Hp = d["H"], d["O"], d["Hp"]
    wdt = prepared["w_hh"].dtype
    q = lambda v: v.astype(wdt).astype(jnp.float32)

    emb = prepared["embedding"].astype(jnp.float32)
    wih = prepared["w_ih"].astype(jnp.float32)
    whh = prepared["w_hh"].astype(jnp.float32)
    bih, bhh = prepared["b_ih"], prepared["b_hh"]
    wout = prepared["w_out"].astype(jnp.float32)
    bout = prepared["b_out"]

    def cell(ig, h):
        hg = q(h) @ whh + bhh
        i_r, i_z, i_n = jnp.split(ig, 3, axis=-1)
        h_r, h_z, h_n = jnp.split(hg, 3, axis=-1)
        r = jax.nn.sigmoid(i_r + h_r)
        z = jax.nn.sigmoid(i_z + h_z)
        n = jnp.tanh(i_n + r * h_n)
        return (1.0 - z) * n + z * h

    h = jnp.zeros((1, Hp), jnp.float32).at[:, :H].set(
        hidden0.reshape(1, H).astype(jnp.float32))
    logps = []
    for t in range(int(token_ids.shape[0])):
        x = emb[token_ids[t]].reshape(1, -1)
        ig = q(x) @ wih + bih
        hn = cell(ig, h)
        for _ in range(n_layers - 1):
            ig_l = q(hn) @ wih + bih
            hn = cell(ig_l, hn)
        h = hn
        logits = q(h) @ wout + bout
        logps.append(jax.nn.log_softmax(logits[:, :O], axis=-1))
    return jnp.concatenate(logps, axis=0), h[:, :H].reshape(1, 1, H)


def make_params(key, vocab_size, input_size, hidden_size, output_size):
    ks = jax.random.split(key, 7)
    scale = 0.1
    return {
        "embedding": scale * jax.random.normal(ks[0], (vocab_size, input_size), jnp.float32),
        "w_ih":      scale * jax.random.normal(ks[1], (3 * hidden_size, input_size), jnp.float32),
        "w_hh":      scale * jax.random.normal(ks[2], (3 * hidden_size, hidden_size), jnp.float32),
        "b_ih":      scale * jax.random.normal(ks[3], (3 * hidden_size,), jnp.float32),
        "b_hh":      scale * jax.random.normal(ks[4], (3 * hidden_size,), jnp.float32),
        "w_out":     scale * jax.random.normal(ks[5], (output_size, hidden_size), jnp.float32),
        "b_out":     scale * jax.random.normal(ks[6], (output_size,), jnp.float32),
    }


if __name__ == "__main__":
    VOCAB, INPUT_SIZE, HIDDEN, OUTPUT = 16, 32, 32, 16
    N_LAYERS, SEQ_LEN, TB = 1, 16, 8

    key = jax.random.PRNGKey(0)
    params = make_params(key, VOCAB, INPUT_SIZE, HIDDEN, OUTPUT)
    prepared = prepare_decoder_params(params, weight_dtype=jnp.bfloat16)

    token_ids = jax.random.randint(jax.random.PRNGKey(1), (SEQ_LEN,), 0, VOCAB,
                                   dtype=jnp.int32)
    hidden0 = jnp.zeros((1, 1, HIDDEN), dtype=jnp.float32)   # initHidden()

    # Fused multi-step decode: blocked recurrence + batched projection kernels.
    logp_seq, hidden_T = decoder_rnn_decode(token_ids, hidden0, prepared,
                                            n_layers=N_LAYERS, tb=TB)
    jax.block_until_ready((logp_seq, hidden_T))

    ref_lp, ref_h = _reference_decode(token_ids, hidden0, prepared,
                                      n_layers=N_LAYERS)
    assert logp_seq.shape == (SEQ_LEN, OUTPUT) and hidden_T.shape == (1, 1, HIDDEN)
    assert jnp.allclose(logp_seq, ref_lp, atol=1e-4), "sequence log_probs mismatch"
    assert jnp.allclose(hidden_T, ref_h, atol=1e-4), "sequence hidden mismatch"

    # Single-step forward (exact DecoderRNN.forward(input, hidden) semantics).
    lp1, h1 = decoder_rnn_forward(token_ids[0], hidden0, prepared,
                                  n_layers=N_LAYERS, tb=TB)
    jax.block_until_ready((lp1, h1))
    assert lp1.shape == (1, OUTPUT) and h1.shape == (1, 1, HIDDEN)
    assert jnp.allclose(lp1, ref_lp[0:1], atol=1e-4), "single-step log_probs mismatch"
    assert jnp.allclose(h1, ref_lp[0:1].shape and _reference_decode(
        token_ids[:1], hidden0, prepared, n_layers=N_LAYERS)[1], atol=1e-4), \
        "single-step hidden mismatch"

    print("KERNEL_OK")
</pallas_src>

<mosaic_0001>
module attributes {stable_mosaic.version = 11 : i64} {
  func.func @_gru_recurrence_kernel(%arg0: i32, %arg1: memref<8x384xf32, #tpu.memory_space<vmem>>, %arg2: memref<1x128xf32, #tpu.memory_space<vmem>>, %arg3: memref<128x384xbf16, #tpu.memory_space<vmem>>, %arg4: memref<1x384xf32, #tpu.memory_space<vmem>>, %arg5: memref<8x128xf32, #tpu.memory_space<vmem>>, %arg6: memref<1x128xf32, #tpu.memory_space<vmem>>) attributes {dimension_semantics = [#tpu.dimension_semantics<arbitrary>], iteration_bounds = array<i64: 2>, scalar_prefetch = 0 : i64, scratch_operands = 0 : i64, tpu.core_type = #tpu.core_type<tc>, window_params = [{transform_indices = @transform_0, window_bounds = array<i64: 8, 384>}, {pipeline_mode = #tpu.pipeline_mode<synchronous>, transform_indices = @transform_1, window_bounds = array<i64: 1, 128>}, {pipeline_mode = #tpu.pipeline_mode<synchronous>, transform_indices = @transform_2, window_bounds = array<i64: 128, 384>}, {pipeline_mode = #tpu.pipeline_mode<synchronous>, transform_indices = @transform_3, window_bounds = array<i64: 1, 384>}, {transform_indices = @transform_4, window_bounds = array<i64: 8, 128>}, {pipeline_mode = #tpu.pipeline_mode<synchronous>, transform_indices = @transform_5, window_bounds = array<i64: 1, 128>}]} {
    %c0_i32 = arith.constant 0 : i32
    %0 = arith.cmpi eq, %arg0, %c0_i32 : i32
    %1 = arith.extui %0 : i1 to i32
    %c0_i32_0 = arith.constant 0 : i32
    %2 = arith.cmpi ne, %1, %c0_i32_0 : i32
    scf.if %2 {
      %c0_70 = arith.constant 0 : index
      %c0_71 = arith.constant 0 : index
      %278 = vector.load %arg2[%c0_70, %c0_71] : memref<1x128xf32, #tpu.memory_space<vmem>>, vector<1x128xf32>
      %c0_72 = arith.constant 0 : index
      %c0_73 = arith.constant 0 : index
      %279 = vector.load %arg6[%c0_72, %c0_73] : memref<1x128xf32, #tpu.memory_space<vmem>>, vector<1x128xf32>
      tpu.vector_store %arg6[%c0_72, %c0_73], %278 {strides = array<i32>} : memref<1x128xf32, #tpu.memory_space<vmem>>, vector<1x128xf32>,
    } else {
    }
    %c0 = arith.constant 0 : index
    %c0_1 = arith.constant 0 : index
    %3 = vector.load %arg4[%c0, %c0_1] : memref<1x384xf32, #tpu.memory_space<vmem>>, vector<1x384xf32>
    %c0_2 = arith.constant 0 : index
    %c0_3 = arith.constant 0 : index
    %4 = vector.load %arg6[%c0_2, %c0_3] : memref<1x128xf32, #tpu.memory_space<vmem>>, vector<1x128xf32>
    %c0_i32_4 = arith.constant 0 : i32
    %5 = arith.index_cast %c0_i32_4 : i32 to index
    %c0_5 = arith.constant 0 : index
    %6 = vector.load %arg1[%5, %c0_5] : memref<8x384xf32, #tpu.memory_space<vmem>>, vector<1x384xf32>
    %7 = arith.truncf %4 : vector<1x128xf32> to vector<1x128xbf16>
    %c0_6 = arith.constant 0 : index
    %c0_7 = arith.constant 0 : index
    %8 = vector.load %arg3[%c0_6, %c0_7] : memref<128x384xbf16, #tpu.memory_space<vmem>>, vector<128x384xbf16>
    %cst = arith.constant dense<0.000000e+00> : vector<1x384xf32>
    %9 = tpu.matmul %7, %8, %cst {dimension_numbers = #tpu.dot_dimension_numbers<[1], [0], [0], [1], [0, 0, 1, 1], [], []>} : vector<1x128xbf16>, vector<128x384xbf16>, vector<1x384xf32> -> vector<1x384xf32>
    %10 = arith.addf %9, %3 : vector<1x384xf32>
    %11 = vector.extract_strided_slice %6 {offsets = [0, 0], sizes = [1, 128], strides = [1, 1]} : vector<1x384xf32> to vector<1x128xf32>
    %12 = vector.extract_strided_slice %6 {offsets = [0, 128], sizes = [1, 128], strides = [1, 1]} : vector<1x384xf32> to vector<1x128xf32>
    %13 = vector.extract_strided_slice %6 {offsets = [0, 256], sizes = [1, 128], strides = [1, 1]} : vector<1x384xf32> to vector<1x128xf32>
    %14 = vector.extract_strided_slice %10 {offsets = [0, 0], sizes = [1, 128], strides = [1, 1]} : vector<1x384xf32> to vector<1x128xf32>
    %15 = vector.extract_strided_slice %10 {offsets = [0, 128], sizes = [1, 128], strides = [1, 1]} : vector<1x384xf32> to vector<1x128xf32>
    %16 = vector.extract_strided_slice %10 {offsets = [0, 256], sizes = [1, 128], strides = [1, 1]} : vector<1x384xf32> to vector<1x128xf32>
    %17 = arith.addf %11, %14 : vector<1x128xf32>
    %18 = arith.negf %17 : vector<1x128xf32>
    %19 = math.exp %18 : vector<1x128xf32>
    %cst_8 = arith.constant 1.000000e+00 : f32
    %20 = vector.broadcast %cst_8 : f32 to vector<1x128xf32>
    %21 = arith.addf %20, %19 : vector<1x128xf32>
    %22 = arith.divf %20, %21 : vector<1x128xf32>
    %23 = arith.addf %12, %15 : vector<1x128xf32>
    %24 = arith.negf %23 : vector<1x128xf32>
    %25 = math.exp %24 : vector<1x128xf32>
    %cst_9 = arith.constant 1.000000e+00 : f32
    %26 = vector.broadcast %cst_9 : f32 to vector<1x128xf32>
    %27 = arith.addf %26, %25 : vector<1x128xf32>
    %28 = arith.divf %26, %27 : vector<1x128xf32>
    %29 = arith.mulf %22, %16 : vector<1x128xf32>
    %30 = arith.addf %13, %29 : vector<1x128xf32>
    %31 = math.tanh %30 : vector<1x128xf32>
    %cst_10 = arith.constant 1.000000e+00 : f32
    %32 = vector.broadcast %cst_10 : f32 to vector<1x128xf32>
    %33 = arith.subf %32, %28 : vector<1x128xf32>
    %34 = arith.mulf %33, %31 : vector<1x128xf32>
    %35 = arith.mulf %28, %4 : vector<1x128xf32>
    %36 = arith.addf %34, %35 : vector<1x128xf32>
    %37 = arith.index_cast %c0_i32_4 : i32 to index
    %c0_11 = arith.constant 0 : index
    %38 = vector.load %arg5[%37, %c0_11] : memref<8x128xf32, #tpu.memory_space<vmem>>, vector<1x128xf32>
    tpu.vector_store %arg5[%37, %c0_11], %36 {strides = array<i32>} : memref<8x128xf32, #tpu.memory_space<vmem>>, vector<1x128xf32>,
    %c1_i32 = arith.constant 1 : i32
    %39 = arith.index_cast %c1_i32 : i32 to index
    %c0_12 = arith.constant 0 : index
    %40 = vector.load %arg1[%39, %c0_12] : memref<8x384xf32, #tpu.memory_space<vmem>>, vector<1x384xf32>
    %41 = arith.truncf %36 : vector<1x128xf32> to vector<1x128xbf16>
    %c0_13 = arith.constant 0 : index
    %c0_14 = arith.constant 0 : index
    %42 = vector.load %arg3[%c0_13, %c0_14] : memref<128x384xbf16, #tpu.memory_space<vmem>>, vector<128x384xbf16>
    %cst_15 = arith.constant dense<0.000000e+00> : vector<1x384xf32>
    %43 = tpu.matmul %41, %42, %cst_15 {dimension_numbers = #tpu.dot_dimension_numbers<[1], [0], [0], [1], [0, 0, 1, 1], [], []>} : vector<1x128xbf16>, vector<128x384xbf16>, vector<1x384xf32> -> vector<1x384xf32>
    %44 = arith.addf %43, %3 : vector<1x384xf32>
    %45 = vector.extract_strided_slice %40 {offsets = [0, 0], sizes = [1, 128], strides = [1, 1]} : vector<1x384xf32> to vector<1x128xf32>
    %46 = vector.extract_strided_slice %40 {offsets = [0, 128], sizes = [1, 128], strides = [1, 1]} : vector<1x384xf32> to vector<1x128xf32>
    %47 = vector.extract_strided_slice %40 {offsets = [0, 256], sizes = [1, 128], strides = [1, 1]} : vector<1x384xf32> to vector<1x128xf32>
    %48 = vector.extract_strided_slice %44 {offsets = [0, 0], sizes = [1, 128], strides = [1, 1]} : vector<1x384xf32> to vector<1x128xf32>
    %49 = vector.extract_strided_slice %44 {offsets = [0, 128], sizes = [1, 128], strides = [1, 1]} : vector<1x384xf32> to vector<1x128xf32>
    %50 = vector.extract_strided_slice %44 {offsets = [0, 256], sizes = [1, 128], strides = [1, 1]} : vector<1x384xf32> to vector<1x128xf32>
    %51 = arith.addf %45, %48 : vector<1x128xf32>
    %52 = arith.negf %51 : vector<1x128xf32>
    %53 = math.exp %52 : vector<1x128xf32>
    %cst_16 = arith.constant 1.000000e+00 : f32
    %54 = vector.broadcast %cst_16 : f32 to vector<1x128xf32>
    %55 = arith.addf %54, %53 : vector<1x128xf32>
    %56 = arith.divf %54, %55 : vector<1x128xf32>
    %57 = arith.addf %46, %49 : vector<1x128xf32>
    %58 = arith.negf %57 : vector<1x128xf32>
    %59 = math.exp %58 : vector<1x128xf32>
    %cst_17 = arith.constant 1.000000e+00 : f32
    %60 = vector.broadcast %cst_17 : f32 to vector<1x128xf32>
    %61 = arith.addf %60, %59 : vector<1x128xf32>
    %62 = arith.divf %60, %61 : vector<1x128xf32>
    %63 = arith.mulf %56, %50 : vector<1x128xf32>
    %64 = arith.addf %47, %63 : vector<1x128xf32>
    %65 = math.tanh %64 : vector<1x128xf32>
    %cst_18 = arith.constant 1.000000e+00 : f32
    %66 = vector.broadcast %cst_18 : f32 to vector<1x128xf32>
    %67 = arith.subf %66, %62 : vector<1x128xf32>
    %68 = arith.mulf %67, %65 : vector<1x128xf32>
    %69 = arith.mulf %62, %36 : vector<1x128xf32>
    %70 = arith.addf %68, %69 : vector<1x128xf32>
    %71 = arith.index_cast %c1_i32 : i32 to index
    %c0_19 = arith.constant 0 : index
    %72 = vector.load %arg5[%71, %c0_19] : memref<8x128xf32, #tpu.memory_space<vmem>>, vector<1x128xf32>
    tpu.vector_store %arg5[%71, %c0_19], %70 {strides = array<i32>} : memref<8x128xf32, #tpu.memory_space<vmem>>, vector<1x128xf32>,
    %c2_i32 = arith.constant 2 : i32
    %73 = arith.index_cast %c2_i32 : i32 to index
    %c0_20 = arith.constant 0 : index
    %74 = vector.load %arg1[%73, %c0_20] : memref<8x384xf32, #tpu.memory_space<vmem>>, vector<1x384xf32>
    %75 = arith.truncf %70 : vector<1x128xf32> to vector<1x128xbf16>
    %c0_21 = arith.constant 0 : index
    %c0_22 = arith.constant 0 : index
    %76 = vector.load %arg3[%c0_21, %c0_22] : memref<128x384xbf16, #tpu.memory_space<vmem>>, vector<128x384xbf16>
    %cst_23 = arith.constant dense<0.000000e+00> : vector<1x384xf32>
    %77 = tpu.matmul %75, %76, %cst_23 {dimension_numbers = #tpu.dot_dimension_numbers<[1], [0], [0], [1], [0, 0, 1, 1], [], []>} : vector<1x128xbf16>, vector<128x384xbf16>, vector<1x384xf32> -> vector<1x384xf32>
    %78 = arith.addf %77, %3 : vector<1x384xf32>
    %79 = vector.extract_strided_slice %74 {offsets = [0, 0], sizes = [1, 128], strides = [1, 1]} : vector<1x384xf32> to vector<1x128xf32>
    %80 = vector.extract_strided_slice %74 {offsets = [0, 128], sizes = [1, 128], strides = [1, 1]} : vector<1x384xf32> to vector<1x128xf32>
    %81 = vector.extract_strided_slice %74 {offsets = [0, 256], sizes = [1, 128], strides = [1, 1]} : vector<1x384xf32> to vector<1x128xf32>
    %82 = vector.extract_strided_slice %78 {offsets = [0, 0], sizes = [1, 128], strides = [1, 1]} : vector<1x384xf32> to vector<1x128xf32>
    %83 = vector.extract_strided_slice %78 {offsets = [0, 128], sizes = [1, 128], strides = [1, 1]} : vector<1x384xf32> to vector<1x128xf32>
    %84 = vector.extract_strided_slice %78 {offsets = [0, 256], sizes = [1, 128], strides = [1, 1]} : vector<1x384xf32> to vector<1x128xf32>
    %85 = arith.addf %79, %82 : vector<1x128xf32>
    %86 = arith.negf %85 : vector<1x128xf32>
    %87 = math.exp %86 : vector<1x128xf32>
    %cst_24 = arith.constant 1.000000e+00 : f32
    %88 = vector.broadcast %cst_24 : f32 to vector<1x128xf32>
    %89 = arith.addf %88, %87 : vector<1x128xf32>
    %90 = arith.divf %88, %89 : vector<1x128xf32>
    %91 = arith.addf %80, %83 : vector<1x128xf32>
    %92 = arith.negf %91 : vector<1x128xf32>
    %93 = math.exp %92 : vector<1x128xf32>
    %cst_25 = arith.constant 1.000000e+00 : f32
    %94 = vector.broadcast %cst_25 : f32 to vector<1x128xf32>
    %95 = arith.addf %94, %93 : vector<1x128xf32>
    %96 = arith.divf %94, %95 : vector<1x128xf32>
    %97 = arith.mulf %90, %84 : vector<1x128xf32>
    %98 = arith.addf %81, %97 : vector<1x128xf32>
    %99 = math.tanh %98 : vector<1x128xf32>
    %cst_26 = arith.constant 1.000000e+00 : f32
    %100 = vector.broadcast %cst_26 : f32 to vector<1x128xf32>
    %101 = arith.subf %100, %96 : vector<1x128xf32>
    %102 = arith.mulf %101, %99 : vector<1x128xf32>
    %103 = arith.mulf %96, %70 : vector<1x128xf32>
    %104 = arith.addf %102, %103 : vector<1x128xf32>
    %105 = arith.index_cast %c2_i32 : i32 to index
    %c0_27 = arith.constant 0 : index
    %106 = vector.load %arg5[%105, %c0_27] : memref<8x128xf32, #tpu.memory_space<vmem>>, vector<1x128xf32>
    tpu.vector_store %arg5[%105, %c0_27], %104 {strides = array<i32>} : memref<8x128xf32, #tpu.memory_space<vmem>>, vector<1x128xf32>,
    %c3_i32 = arith.constant 3 : i32
    %107 = arith.index_cast %c3_i32 : i32 to index
    %c0_28 = arith.constant 0 : index
    %108 = vector.load %arg1[%107, %c0_28] : memref<8x384xf32, #tpu.memory_space<vmem>>, vector<1x384xf32>
    %109 = arith.truncf %104 : vector<1x128xf32> to vector<1x128xbf16>
    %c0_29 = arith.constant 0 : index
    %c0_30 = arith.constant 0 : index
    %110 = vector.load %arg3[%c0_29, %c0_30] : memref<128x384xbf16, #tpu.memory_space<vmem>>, vector<128x384xbf16>
    %cst_31 = arith.constant dense<0.000000e+00> : vector<1x384xf32>
    %111 = tpu.matmul %109, %110, %cst_31 {dimension_numbers = #tpu.dot_dimension_numbers<[1], [0], [0], [1], [0, 0, 1, 1], [], []>} : vector<1x128xbf16>, vector<128x384xbf16>, vector<1x384xf32> -> vector<1x384xf32>
    %112 = arith.addf %111, %3 : vector<1x384xf32>
    %113 = vector.extract_strided_slice %108 {offsets = [0, 0], sizes = [1, 128], strides = [1, 1]} : vector<1x384xf32> to vector<1x128xf32>
    %114 = vector.extract_strided_slice %108 {offsets = [0, 128], sizes = [1, 128], strides = [1, 1]} : vector<1x384xf32> to vector<1x128xf32>
    %115 = vector.extract_strided_slice %108 {offsets = [0, 256], sizes = [1, 128], strides = [1, 1]} : vector<1x384xf32> to vector<1x128xf32>
    %116 = vector.extract_strided_slice %112 {offsets = [0, 0], sizes = [1, 128], strides = [1, 1]} : vector<1x384xf32> to vector<1x128xf32>
    %117 = vector.extract_strided_slice %112 {offsets = [0, 128], sizes = [1, 128], strides = [1, 1]} : vector<1x384xf32> to vector<1x128xf32>
    %118 = vector.extract_strided_slice %112 {offsets = [0, 256], sizes = [1, 128], strides = [1, 1]} : vector<1x384xf32> to vector<1x128xf32>
    %119 = arith.addf %113, %116 : vector<1x128xf32>
    %120 = arith.negf %119 : vector<1x128xf32>
    %121 = math.exp %120 : vector<1x128xf32>
    %cst_32 = arith.constant 1.000000e+00 : f32
    %122 = vector.broadcast %cst_32 : f32 to vector<1x128xf32>
    %123 = arith.addf %122, %121 : vector<1x128xf32>
    %124 = arith.divf %122, %123 : vector<1x128xf32>
    %125 = arith.addf %114, %117 : vector<1x128xf32>
    %126 = arith.negf %125 : vector<1x128xf32>
    %127 = math.exp %126 : vector<1x128xf32>
    %cst_33 = arith.constant 1.000000e+00 : f32
    %128 = vector.broadcast %cst_33 : f32 to vector<1x128xf32>
    %129 = arith.addf %128, %127 : vector<1x128xf32>
    %130 = arith.divf %128, %129 : vector<1x128xf32>
    %131 = arith.mulf %124, %118 : vector<1x128xf32>
    %132 = arith.addf %115, %131 : vector<1x128xf32>
    %133 = math.tanh %132 : vector<1x128xf32>
    %cst_34 = arith.constant 1.000000e+00 : f32
    %134 = vector.broadcast %cst_34 : f32 to vector<1x128xf32>
    %135 = arith.subf %134, %130 : vector<1x128xf32>
    %136 = arith.mulf %135, %133 : vector<1x128xf32>
    %137 = arith.mulf %130, %104 : vector<1x128xf32>
    %138 = arith.addf %136, %137 : vector<1x128xf32>
    %139 = arith.index_cast %c3_i32 : i32 to index
    %c0_35 = arith.constant 0 : index
    %140 = vector.load %arg5[%139, %c0_35] : memref<8x128xf32, #tpu.memory_space<vmem>>, vector<1x128xf32>
    tpu.vector_store %arg5[%139, %c0_35], %138 {strides = array<i32>} : memref<8x128xf32, #tpu.memory_space<vmem>>, vector<1x128xf32>,
    %c4_i32 = arith.constant 4 : i32
    %141 = arith.index_cast %c4_i32 : i32 to index
    %c0_36 = arith.constant 0 : index
    %142 = vector.load %arg1[%141, %c0_36] : memref<8x384xf32, #tpu.memory_space<vmem>>, vector<1x384xf32>
    %143 = arith.truncf %138 : vector<1x128xf32> to vector<1x128xbf16>
    %c0_37 = arith.constant 0 : index
    %c0_38 = arith.constant 0 : index
    %144 = vector.load %arg3[%c0_37, %c0_38] : memref<128x384xbf16, #tpu.memory_space<vmem>>, vector<128x384xbf16>
    %cst_39 = arith.constant dense<0.000000e+00> : vector<1x384xf32>
    %145 = tpu.matmul %143, %144, %cst_39 {dimension_numbers = #tpu.dot_dimension_numbers<[1], [0], [0], [1], [0, 0, 1, 1], [], []>} : vector<1x128xbf16>, vector<128x384xbf16>, vector<1x384xf32> -> vector<1x384xf32>
    %146 = arith.addf %145, %3 : vector<1x384xf32>
    %147 = vector.extract_strided_slice %142 {offsets = [0, 0], sizes = [1, 128], strides = [1, 1]} : vector<1x384xf32> to vector<1x128xf32>
    %148 = vector.extract_strided_slice %142 {offsets = [0, 128], sizes = [1, 128], strides = [1, 1]} : vector<1x384xf32> to vector<1x128xf32>
    %149 = vector.extract_strided_slice %142 {offsets = [0, 256], sizes = [1, 128], strides = [1, 1]} : vector<1x384xf32> to vector<1x128xf32>
    %150 = vector.extract_strided_slice %146 {offsets = [0, 0], sizes = [1, 128], strides = [1, 1]} : vector<1x384xf32> to vector<1x128xf32>
    %151 = vector.extract_strided_slice %146 {offsets = [0, 128], sizes = [1, 128], strides = [1, 1]} : vector<1x384xf32> to vector<1x128xf32>
    %152 = vector.extract_strided_slice %146 {offsets = [0, 256], sizes = [1, 128], strides = [1, 1]} : vector<1x384xf32> to vector<1x128xf32>
    %153 = arith.addf %147, %150 : vector<1x128xf32>
    %154 = arith.negf %153 : vector<1x128xf32>
    %155 = math.exp %154 : vector<1x128xf32>
    %cst_40 = arith.constant 1.000000e+00 : f32
    %156 = vector.broadcast %cst_40 : f32 to vector<1x128xf32>
    %157 = arith.addf %156, %155 : vector<1x128xf32>
    %158 = arith.divf %156, %157 : vector<1x128xf32>
    %159 = arith.addf %148, %151 : vector<1x128xf32>
    %160 = arith.negf %159 : vector<1x128xf32>
    %161 = math.exp %160 : vector<1x128xf32>
    %cst_41 = arith.constant 1.000000e+00 : f32
    %162 = vector.broadcast %cst_41 : f32 to vector<1x128xf32>
    %163 = arith.addf %162, %161 : vector<1x128xf32>
    %164 = arith.divf %162, %163 : vector<1x128xf32>
    %165 = arith.mulf %158, %152 : vector<1x128xf32>
    %166 = arith.addf %149, %165 : vector<1x128xf32>
    %167 = math.tanh %166 : vector<1x128xf32>
    %cst_42 = arith.constant 1.000000e+00 : f32
    %168 = vector.broadcast %cst_42 : f32 to vector<1x128xf32>
    %169 = arith.subf %168, %164 : vector<1x128xf32>
    %170 = arith.mulf %169, %167 : vector<1x128xf32>
    %171 = arith.mulf %164, %138 : vector<1x128xf32>
    %172 = arith.addf %170, %171 : vector<1x128xf32>
    %173 = arith.index_cast %c4_i32 : i32 to index
    %c0_43 = arith.constant 0 : index
    %174 = vector.load %arg5[%173, %c0_43] : memref<8x128xf32, #tpu.memory_space<vmem>>, vector<1x128xf32>
    tpu.vector_store %arg5[%173, %c0_43], %172 {strides = array<i32>} : memref<8x128xf32, #tpu.memory_space<vmem>>, vector<1x128xf32>,
    %c5_i32 = arith.constant 5 : i32
    %175 = arith.index_cast %c5_i32 : i32 to index
    %c0_44 = arith.constant 0 : index
    %176 = vector.load %arg1[%175, %c0_44] : memref<8x384xf32, #tpu.memory_space<vmem>>, vector<1x384xf32>
    %177 = arith.truncf %172 : vector<1x128xf32> to vector<1x128xbf16>
    %c0_45 = arith.constant 0 : index
    %c0_46 = arith.constant 0 : index
    %178 = vector.load %arg3[%c0_45, %c0_46] : memref<128x384xbf16, #tpu.memory_space<vmem>>, vector<128x384xbf16>
    %cst_47 = arith.constant dense<0.000000e+00> : vector<1x384xf32>
    %179 = tpu.matmul %177, %178, %cst_47 {dimension_numbers = #tpu.dot_dimension_numbers<[1], [0], [0], [1], [0, 0, 1, 1], [], []>} : vector<1x128xbf16>, vector<128x384xbf16>, vector<1x384xf32> -> vector<1x384xf32>
    %180 = arith.addf %179, %3 : vector<1x384xf32>
    %181 = vector.extract_strided_slice %176 {offsets = [0, 0], sizes = [1, 128], strides = [1, 1]} : vector<1x384xf32> to vector<1x128xf32>
    %182 = vector.extract_strided_slice %176 {offsets = [0, 128], sizes = [1, 128], strides = [1, 1]} : vector<1x384xf32> to vector<1x128xf32>
    %183 = vector.extract_strided_slice %176 {offsets = [0, 256], sizes = [1, 128], strides = [1, 1]} : vector<1x384xf32> to vector<1x128xf32>
    %184 = vector.extract_strided_slice %180 {offsets = [0, 0], sizes = [1, 128], strides = [1, 1]} : vector<1x384xf32> to vector<1x128xf32>
    %185 = vector.extract_strided_slice %180 {offsets = [0, 128], sizes = [1, 128], strides = [1, 1]} : vector<1x384xf32> to vector<1x128xf32>
    %186 = vector.extract_strided_slice %180 {offsets = [0, 256], sizes = [1, 128], strides = [1, 1]} : vector<1x384xf32> to vector<1x128xf32>
    %187 = arith.addf %181, %184 : vector<1x128xf32>
    %188 = arith.negf %187 : vector<1x128xf32>
    %189 = math.exp %188 : vector<1x128xf32>
    %cst_48 = arith.constant 1.000000e+00 : f32
    %190 = vector.broadcast %cst_48 : f32 to vector<1x128xf32>
    %191 = arith.addf %190, %189 : vector<1x128xf32>
    %192 = arith.divf %190, %191 : vector<1x128xf32>
    %193 = arith.addf %182, %185 : vector<1x128xf32>
    %194 = arith.negf %193 : vector<1x128xf32>
    %195 = math.exp %194 : vector<1x128xf32>
    %cst_49 = arith.constant 1.000000e+00 : f32
    %196 = vector.broadcast %cst_49 : f32 to vector<1x128xf32>
    %197 = arith.addf %196, %195 : vector<1x128xf32>
    %198 = arith.divf %196, %197 : vector<1x128xf32>
    %199 = arith.mulf %192, %186 : vector<1x128xf32>
    %200 = arith.addf %183, %199 : vector<1x128xf32>
    %201 = math.tanh %200 : vector<1x128xf32>
    %cst_50 = arith.constant 1.000000e+00 : f32
    %202 = vector.broadcast %cst_50 : f32 to vector<1x128xf32>
    %203 = arith.subf %202, %198 : vector<1x128xf32>
    %204 = arith.mulf %203, %201 : vector<1x128xf32>
    %205 = arith.mulf %198, %172 : vector<1x128xf32>
    %206 = arith.addf %204, %205 : vector<1x128xf32>
    %207 = arith.index_cast %c5_i32 : i32 to index
    %c0_51 = arith.constant 0 : index
    %208 = vector.load %arg5[%207, %c0_51] : memref<8x128xf32, #tpu.memory_space<vmem>>, vector<1x128xf32>
    tpu.vector_store %arg5[%207, %c0_51], %206 {strides = array<i32>} : memref<8x128xf32, #tpu.memory_space<vmem>>, vector<1x128xf32>,
    %c6_i32 = arith.constant 6 : i32
    %209 = arith.index_cast %c6_i32 : i32 to index
    %c0_52 = arith.constant 0 : index
    %210 = vector.load %arg1[%209, %c0_52] : memref<8x384xf32, #tpu.memory_space<vmem>>, vector<1x384xf32>
    %211 = arith.truncf %206 : vector<1x128xf32> to vector<1x128xbf16>
    %c0_53 = arith.constant 0 : index
    %c0_54 = arith.constant 0 : index
    %212 = vector.load %arg3[%c0_53, %c0_54] : memref<128x384xbf16, #tpu.memory_space<vmem>>, vector<128x384xbf16>
    %cst_55 = arith.constant dense<0.000000e+00> : vector<1x384xf32>
    %213 = tpu.matmul %211, %212, %cst_55 {dimension_numbers = #tpu.dot_dimension_numbers<[1], [0], [0], [1], [0, 0, 1, 1], [], []>} : vector<1x128xbf16>, vector<128x384xbf16>, vector<1x384xf32> -> vector<1x384xf32>
    %214 = arith.addf %213, %3 : vector<1x384xf32>
    %215 = vector.extract_strided_slice %210 {offsets = [0, 0], sizes = [1, 128], strides = [1, 1]} : vector<1x384xf32> to vector<1x128xf32>
    %216 = vector.extract_strided_slice %210 {offsets = [0, 128], sizes = [1, 128], strides = [1, 1]} : vector<1x384xf32> to vector<1x128xf32>
    %217 = vector.extract_strided_slice %210 {offsets = [0, 256], sizes = [1, 128], strides = [1, 1]} : vector<1x384xf32> to vector<1x128xf32>
    %218 = vector.extract_strided_slice %214 {offsets = [0, 0], sizes = [1, 128], strides = [1, 1]} : vector<1x384xf32> to vector<1x128xf32>
    %219 = vector.extract_strided_slice %214 {offsets = [0, 128], sizes = [1, 128], strides = [1, 1]} : vector<1x384xf32> to vector<1x128xf32>
    %220 = vector.extract_strided_slice %214 {offsets = [0, 256], sizes = [1, 128], strides = [1, 1]} : vector<1x384xf32> to vector<1x128xf32>
    %221 = arith.addf %215, %218 : vector<1x128xf32>
    %222 = arith.negf %221 : vector<1x128xf32>
    %223 = math.exp %222 : vector<1x128xf32>
    %cst_56 = arith.constant 1.000000e+00 : f32
    %224 = vector.broadcast %cst_56 : f32 to vector<1x128xf32>
    %225 = arith.addf %224, %223 : vector<1x128xf32>
    %226 = arith.divf %224, %225 : vector<1x128xf32>
    %227 = arith.addf %216, %219 : vector<1x128xf32>
    %228 = arith.negf %227 : vector<1x128xf32>
    %229 = math.exp %228 : vector<1x128xf32>
    %cst_57 = arith.constant 1.000000e+00 : f32
    %230 = vector.broadcast %cst_57 : f32 to vector<1x128xf32>
    %231 = arith.addf %230, %229 : vector<1x128xf32>
    %232 = arith.divf %230, %231 : vector<1x128xf32>
    %233 = arith.mulf %226, %220 : vector<1x128xf32>
    %234 = arith.addf %217, %233 : vector<1x128xf32>
    %235 = math.tanh %234 : vector<1x128xf32>
    %cst_58 = arith.constant 1.000000e+00 : f32
    %236 = vector.broadcast %cst_58 : f32 to vector<1x128xf32>
    %237 = arith.subf %236, %232 : vector<1x128xf32>
    %238 = arith.mulf %237, %235 : vector<1x128xf32>
    %239 = arith.mulf %232, %206 : vector<1x128xf32>
    %240 = arith.addf %238, %239 : vector<1x128xf32>
    %241 = arith.index_cast %c6_i32 : i32 to index
    %c0_59 = arith.constant 0 : index
    %242 = vector.load %arg5[%241, %c0_59] : memref<8x128xf32, #tpu.memory_space<vmem>>, vector<1x128xf32>
    tpu.vector_store %arg5[%241, %c0_59], %240 {strides = array<i32>} : memref<8x128xf32, #tpu.memory_space<vmem>>, vector<1x128xf32>,
    %c7_i32 = arith.constant 7 : i32
    %243 = arith.index_cast %c7_i32 : i32 to index
    %c0_60 = arith.constant 0 : index
    %244 = vector.load %arg1[%243, %c0_60] : memref<8x384xf32, #tpu.memory_space<vmem>>, vector<1x384xf32>
    %245 = arith.truncf %240 : vector<1x128xf32> to vector<1x128xbf16>
    %c0_61 = arith.constant 0 : index
    %c0_62 = arith.constant 0 : index
    %246 = vector.load %arg3[%c0_61, %c0_62] : memref<128x384xbf16, #tpu.memory_space<vmem>>, vector<128x384xbf16>
    %cst_63 = arith.constant dense<0.000000e+00> : vector<1x384xf32>
    %247 = tpu.matmul %245, %246, %cst_63 {dimension_numbers = #tpu.dot_dimension_numbers<[1], [0], [0], [1], [0, 0, 1, 1], [], []>} : vector<1x128xbf16>, vector<128x384xbf16>, vector<1x384xf32> -> vector<1x384xf32>
    %248 = arith.addf %247, %3 : vector<1x384xf32>
    %249 = vector.extract_strided_slice %244 {offsets = [0, 0], sizes = [1, 128], strides = [1, 1]} : vector<1x384xf32> to vector<1x128xf32>
    %250 = vector.extract_strided_slice %244 {offsets = [0, 128], sizes = [1, 128], strides = [1, 1]} : vector<1x384xf32> to vector<1x128xf32>
    %251 = vector.extract_strided_slice %244 {offsets = [0, 256], sizes = [1, 128], strides = [1, 1]} : vector<1x384xf32> to vector<1x128xf32>
    %252 = vector.extract_strided_slice %248 {offsets = [0, 0], sizes = [1, 128], strides = [1, 1]} : vector<1x384xf32> to vector<1x128xf32>
    %253 = vector.extract_strided_slice %248 {offsets = [0, 128], sizes = [1, 128], strides = [1, 1]} : vector<1x384xf32> to vector<1x128xf32>
    %254 = vector.extract_strided_slice %248 {offsets = [0, 256], sizes = [1, 128], strides = [1, 1]} : vector<1x384xf32> to vector<1x128xf32>
    %255 = arith.addf %249, %252 : vector<1x128xf32>
    %256 = arith.negf %255 : vector<1x128xf32>
    %257 = math.exp %256 : vector<1x128xf32>
    %cst_64 = arith.constant 1.000000e+00 : f32
    %258 = vector.broadcast %cst_64 : f32 to vector<1x128xf32>
    %259 = arith.addf %258, %257 : vector<1x128xf32>
    %260 = arith.divf %258, %259 : vector<1x128xf32>
    %261 = arith.addf %250, %253 : vector<1x128xf32>
    %262 = arith.negf %261 : vector<1x128xf32>
    %263 = math.exp %262 : vector<1x128xf32>
    %cst_65 = arith.constant 1.000000e+00 : f32
    %264 = vector.broadcast %cst_65 : f32 to vector<1x128xf32>
    %265 = arith.addf %264, %263 : vector<1x128xf32>
    %266 = arith.divf %264, %265 : vector<1x128xf32>
    %267 = arith.mulf %260, %254 : vector<1x128xf32>
    %268 = arith.addf %251, %267 : vector<1x128xf32>
    %269 = math.tanh %268 : vector<1x128xf32>
    %cst_66 = arith.constant 1.000000e+00 : f32
    %270 = vector.broadcast %cst_66 : f32 to vector<1x128xf32>
    %271 = arith.subf %270, %266 : vector<1x128xf32>
    %272 = arith.mulf %271, %269 : vector<1x128xf32>
    %273 = arith.mulf %266, %240 : vector<1x128xf32>
    %274 = arith.addf %272, %273 : vector<1x128xf32>
    %275 = arith.index_cast %c7_i32 : i32 to index
    %c0_67 = arith.constant 0 : index
    %276 = vector.load %arg5[%275, %c0_67] : memref<8x128xf32, #tpu.memory_space<vmem>>, vector<1x128xf32>
    tpu.vector_store %arg5[%275, %c0_67], %274 {strides = array<i32>} : memref<8x128xf32, #tpu.memory_space<vmem>>, vector<1x128xf32>,
    %c8_i32 = arith.constant 8 : i32
    %c0_68 = arith.constant 0 : index
    %c0_69 = arith.constant 0 : index
    %277 = vector.load %arg6[%c0_68, %c0_69] : memref<1x128xf32, #tpu.memory_space<vmem>>, vector<1x128xf32>
    tpu.vector_store %arg6[%c0_68, %c0_69], %274 {strides = array<i32>} : memref<1x128xf32, #tpu.memory_space<vmem>>, vector<1x128xf32>,
    return
  }
  func.func @transform_0(%arg0: i32) -> (i32, i32) {
    %c0_i32 = arith.constant 0 : i32
    %c0_i32_0 = arith.constant 0 : i32
    return %arg0, %c0_i32 : i32, i32
  }
  func.func @transform_1(%arg0: i32) -> (i32, i32) {
    %c0_i32 = arith.constant 0 : i32
    %c0_i32_0 = arith.constant 0 : i32
    %c0_i32_1 = arith.constant 0 : i32
    return %c0_i32, %c0_i32_0 : i32, i32
  }
  func.func @transform_2(%arg0: i32) -> (i32, i32) {
    %c0_i32 = arith.constant 0 : i32
    %c0_i32_0 = arith.constant 0 : i32
    %c0_i32_1 = arith.constant 0 : i32
    return %c0_i32, %c0_i32_0 : i32, i32
  }
  func.func @transform_3(%arg0: i32) -> (i32, i32) {
    %c0_i32 = arith.constant 0 : i32
    %c0_i32_0 = arith.constant 0 : i32
    %c0_i32_1 = arith.constant 0 : i32
    return %c0_i32, %c0_i32_0 : i32, i32
  }
  func.func @transform_4(%arg0: i32) -> (i32, i32) {
    %c0_i32 = arith.constant 0 : i32
    %c0_i32_0 = arith.constant 0 : i32
    return %arg0, %c0_i32 : i32, i32
  }
  func.func @transform_5(%arg0: i32) -> (i32, i32) {
    %c0_i32 = arith.constant 0 : i32
    %c0_i32_0 = arith.constant 0 : i32
    %c0_i32_1 = arith.constant 0 : i32
    return %c0_i32, %c0_i32_0 : i32, i32
  }
}

</mosaic_0001>

<llo_original>
// kernel: tpu_custom_call.1
$region0: #{tpu_custom_call.1}
  #allocation0 [shape = 'u32[]', space=smem, size = 0x4, offset = 0x4, fixed_abs, tag = 'smem constant byte address 0x4 - core index']
  #allocation1 [shape = 'u32[72,128]{1,0:T(1,128)}', space=vmem, size = 0x9000, scoped, tag = 'internal scratch']
  %s0 = inlined_call_operand.hbm [shape: f32[16,384], index: 0, kind: input, shape index: {}]
  %s1 = inlined_call_operand.hbm [shape: f32[1,128], index: 1, kind: input, shape index: {}]
  %s2 = inlined_call_operand.hbm [shape: bf16[128,384], index: 2, kind: input, shape index: {}]
  %s3 = inlined_call_operand.hbm [shape: f32[1,384], index: 3, kind: input, shape index: {}]
  %s4 = inlined_call_operand.hbm [shape: f32[16,128], index: 4, kind: output, shape index: {0}]
  %s5 = inlined_call_operand.hbm [shape: f32[1,128], index: 5, kind: output, shape index: {1}]
  %6 = xla_tuple %s4, %s5
  %s7 = sld [smem:[#allocation0]]
  $region77: #{tpu_custom_call.1} parent=0
    _
  %s9 = ssub.s32 1, %s7
  %s10 = scalar_select 0, %s9, %s7
  $region1: #{tpu_custom_call.1} parent=0
    #allocation2 [shape = 'u8[24576]{0}', space=vmem, size = 0x6000, scoped, tag = 'input window, operand 0']
    #allocation3 [shape = 's32[2]{0}', space=sflag, size = 0x8, scoped, tag = 'scoped memory for tpu_custom_call.1']
    #allocation4 [shape = 's32[2]{0}', space=sflag, size = 0x8, scoped, tag = 'scoped memory for tpu_custom_call.1']
    #allocation5 [shape = 'u8[512]{0}', space=vmem, size = 0x400, scoped, tag = 'input window, operand 1, single buffered']
    #allocation6 [shape = 's32[1]{0}', space=sflag, size = 0x4, scoped, tag = 'scoped memory for tpu_custom_call.1']
    #allocation7 [shape = 'u8[98304]{0}', space=vmem, size = 0x18000, scoped, tag = 'input window, operand 2, single buffered']
    #allocation8 [shape = 'u8[1536]{0}', space=vmem, size = 0x800, scoped, tag = 'input window, operand 3, single buffered']
    #allocation9 [shape = 's32[1]{0}', space=sflag, size = 0x4, scoped, tag = 'scoped memory for tpu_custom_call.1']
    #allocation10 [shape = 'u8[8192]{0}', space=vmem, size = 0x2000, scoped, tag = 'output window, operand 0']
    #allocation11 [shape = 'u8[512]{0}', space=vmem, size = 0x400, scoped, tag = 'output window, operand 1, single buffered']
    #allocation12 [shape = 's32[1]{0}', space=sflag, size = 0x4, scoped, tag = 'scoped memory for tpu_custom_call.1']
    %11 = vsyncpa [#allocation3], 0
    %s12 = scalar_lea.sflag [#allocation3], 1
    %13 = vsyncpa %s12, 0
    %14 = vsyncpa [#allocation6], 0
    %15 = vsyncpa [#allocation9], 0
    %16 = vsyncpa [#allocation4], 0
    %s17 = scalar_lea.sflag [#allocation4], 1
    %18 = vsyncpa %s17, 0
    %19 = vsyncpa [#allocation12], 0
    loop: start=0, step=1, limit=4
    $region2: #{tpu_custom_call.1} parent=1 // loop_pre_header
      _
    $region3: #{tpu_custom_call.1} parent=1 // loop_header
      %s21 = sphi 0, %s25
      %p22 = scmp.ge.s32.totalorder %s21, 4
      %s31 = sphi 0, %s33
      %s34 = sphi 0, %s31
      %s35 = sphi 0, %s34
      %s51 = sphi 0, %s35
      %s55 = sphi 0, %s55
      %s57 = sphi 0, %s55
      %s58 = sphi 0, %s57
      %s72 = sphi 0, %s58
      %s76 = sphi 0, %s76
      %s78 = sphi 0, %s76
      %s79 = sphi 0, %s78
      %s93 = sphi 0, %s79
      %s97 = sphi 0, %s97
      %s99 = sphi 0, %s97
      %s100 = sphi 0, %s99
      %s114 = sphi 0, %s100
      %s120 = sphi 0, %s122
      %s123 = sphi 0, %s120
      %s124 = sphi 0, %s123
      %s140 = sphi 0, %s124
      %s144 = sphi 0, %s144
      %s146 = sphi 0, %s144
      %s147 = sphi 0, %s146
      %s161 = sphi 0, %s147
    $region4: #{tpu_custom_call.1} parent=1 // loop_header_branch
      %24 = sbr.rel (%p22) target = $region8
    $region5: #{tpu_custom_call.1} parent=1 // loop_body
      %s26 = ssub.s32 %s21, 1
      %s27 = ssub.s32 %s21, 2
      %s28 = sadd.s32 %s21, 1
      %s29 = ssub.s32 %s21, %s28
      %p30 = scmp.eq.s32.totalorder %s29, 0
      %s32 = sadd.s32 %s31, 1
      %s33 = scalar_select %p30, %s31, %s32
      %p36 = pneg %p30
      %p37 = scmp.eq.s32.totalorder %s21, 1
      %p38 = por %p36, %p37
      %p39 = scmp.ne.s32.totalorder %s31, %s34
      %p40 = scmp.eq.s32.totalorder %s21, 0
      %p41 = por %p39, %p40
      %p42 = scmp.ne.s32.totalorder %s31, %s34
      %p43 = scmp.eq.s32.totalorder %s26, 1
      %p44 = por %p42, %p43
      %p45 = scmp.ne.s32.totalorder %s34, %s35
      %p46 = scmp.eq.s32.totalorder %s26, 0
      %p47 = por %p45, %p46
      %p48 = scmp.ne.s32.totalorder %s34, %s35
      %p49 = scmp.eq.s32.totalorder %s27, 1
      %p50 = por %p48, %p49
      %p52 = scmp.ne.s32.totalorder %s35, %s51
      %p53 = scmp.eq.s32.totalorder %s27, 0
      %p54 = por %p52, %p53
      %s56 = sadd.s32 %s55, 1
      %p59 = scmp.eq.s32.totalorder %s21, 1
      %p60 = scmp.ne.s32.totalorder %s55, %s57
      %p61 = scmp.eq.s32.totalorder %s21, 0
      %p62 = por %p60, %p61
      %p63 = scmp.ne.s32.totalorder %s55, %s57
      %p64 = scmp.eq.s32.totalorder %s26, 1
      %p65 = por %p63, %p64
      %p66 = scmp.ne.s32.totalorder %s57, %s58
      %p67 = scmp.eq.s32.totalorder %s26, 0
      %p68 = por %p66, %p67
      %p69 = scmp.ne.s32.totalorder %s57, %s58
      %p70 = scmp.eq.s32.totalorder %s27, 1
      %p71 = por %p69, %p70
      %p73 = scmp.ne.s32.totalorder %s58, %s72
      %p74 = scmp.eq.s32.totalorder %s27, 0
      %p75 = por %p73, %p74
      %s77 = sadd.s32 %s76, 1
      %p80 = scmp.eq.s32.totalorder %s21, 1
      %p81 = scmp.ne.s32.totalorder %s76, %s78
      %p82 = scmp.eq.s32.totalorder %s21, 0
      %p83 = por %p81, %p82
      %p84 = scmp.ne.s32.totalorder %s76, %s78
      %p85 = scmp.eq.s32.totalorder %s26, 1
      %p86 = por %p84, %p85
      %p87 = scmp.ne.s32.totalorder %s78, %s79
      %p88 = scmp.eq.s32.totalorder %s26, 0
      %p89 = por %p87, %p88
      %p90 = scmp.ne.s32.totalorder %s78, %s79
      %p91 = scmp.eq.s32.totalorder %s27, 1
      %p92 = por %p90, %p91
      %p94 = scmp.ne.s32.totalorder %s79, %s93
      %p95 = scmp.eq.s32.totalorder %s27, 0
      %p96 = por %p94, %p95
      %s98 = sadd.s32 %s97, 1
      %p101 = scmp.eq.s32.totalorder %s21, 1
      %p102 = scmp.ne.s32.totalorder %s97, %s99
      %p103 = scmp.eq.s32.totalorder %s21, 0
      %p104 = por %p102, %p103
      %p105 = scmp.ne.s32.totalorder %s97, %s99
      %p106 = scmp.eq.s32.totalorder %s26, 1
      %p107 = por %p105, %p106
      %p108 = scmp.ne.s32.totalorder %s99, %s100
      %p109 = scmp.eq.s32.totalorder %s26, 0
      %p110 = por %p108, %p109
      %p111 = scmp.ne.s32.totalorder %s99, %s100
      %p112 = scmp.eq.s32.totalorder %s27, 1
      %p113 = por %p111, %p112
      %p115 = scmp.ne.s32.totalorder %s100, %s114
      %p116 = scmp.eq.s32.totalorder %s27, 0
      %p117 = por %p115, %p116
      %s118 = ssub.s32 %s21, %s28
      %p119 = scmp.eq.s32.totalorder %s118, 0
      %s121 = sadd.s32 %s120, 1
      %s122 = scalar_select %p119, %s120, %s121
      %p125 = pneg %p119
      %p126 = scmp.eq.s32.totalorder %s21, 1
      %p127 = por %p125, %p126
      %p128 = scmp.ne.s32.totalorder %s120, %s123
      %p129 = scmp.eq.s32.totalorder %s21, 0
      %p130 = por %p128, %p129
      %p131 = scmp.ne.s32.totalorder %s120, %s123
      %p132 = scmp.eq.s32.totalorder %s26, 1
      %p133 = por %p131, %p132
      %p134 = scmp.ne.s32.totalorder %s123, %s124
      %p135 = scmp.eq.s32.totalorder %s26, 0
      %p136 = por %p134, %p135
      %p137 = scmp.ne.s32.totalorder %s123, %s124
      %p138 = scmp.eq.s32.totalorder %s27, 1
      %p139 = por %p137, %p138
      %p141 = scmp.ne.s32.totalorder %s124, %s140
      %p142 = scmp.eq.s32.totalorder %s27, 0
      %p143 = por %p141, %p142
      %s145 = sadd.s32 %s144, 1
      %p148 = scmp.eq.s32.totalorder %s21, 1
      %p149 = scmp.ne.s32.totalorder %s144, %s146
      %p150 = scmp.eq.s32.totalorder %s21, 0
      %p151 = por %p149, %p150
      %p152 = scmp.ne.s32.totalorder %s144, %s146
      %p153 = scmp.eq.s32.totalorder %s26, 1
      %p154 = por %p152, %p153
      %p155 = scmp.ne.s32.totalorder %s146, %s147
      %p156 = scmp.eq.s32.totalorder %s26, 0
      %p157 = por %p155, %p156
      %p158 = scmp.ne.s32.totalorder %s146, %s147
      %p159 = scmp.eq.s32.totalorder %s27, 1
      %p160 = por %p158, %p159
      %p162 = scmp.ne.s32.totalorder %s147, %s161
      %p163 = scmp.eq.s32.totalorder %s27, 0
      %p164 = por %p162, %p163
      %p165 = scmp.le.s32.totalorder 1, %s21
      %p166 = scmp.lt.s32.totalorder %s21, 3
      %p167 = pnand %p165, %p166
      %p168 = pneg %p167
      // Predicated region
      $region9: #{tpu_custom_call.1} parent=5 // pred_check
        _
      $region10: #{tpu_custom_call.1} parent=5 // pred_check_branch
        %170 = sbr.rel (%p167) target = $region12
      $region11: #{tpu_custom_call.1} parent=5 // pred_region
        %s171 = ssub.s32 %s21, 1
        // Predicated region
        $region13: #{tpu_custom_call.1} parent=11 // pred_check
          %p172 = pneg %p68
        $region14: #{tpu_custom_call.1} parent=11 // pred_check_branch
          %174 = sbr.rel (%p172) target = $region16
        $region15: #{tpu_custom_call.1} parent=11 // pred_region
          %176 = vsyncadd [#allocation6], 0
          %s178 = sshll.u32 %s1, 4
          %s179 = int_to_ptr.hbm [resolvable:$true] %s178
          %s180 = sshll.u32 [#allocation5], 4
          %s181 = int_to_ptr.vmem [resolvable:$true] %s180
          %183 = dma.hbm_to_vmem [thread:$0]  %s179, 16, %s181, [#allocation6]
        $region16: #{tpu_custom_call.1} parent=11 // pred_fallthru
          _
        // Predicated region
        $region17: #{tpu_custom_call.1} parent=11 // pred_check
          %p184 = pneg %p89
        $region18: #{tpu_custom_call.1} parent=11 // pred_check_branch
          %186 = sbr.rel (%p184) target = $region20
        $region19: #{tpu_custom_call.1} parent=11 // pred_region
          %188 = vsyncadd [#allocation6], 0
          %s189 = sshll.u32 %s2, 4
          %s190 = int_to_ptr.hbm [resolvable:$true] %s189
          %s191 = sshll.u32 [#allocation7], 4
          %s192 = int_to_ptr.vmem [resolvable:$true] %s191
          %197 = dma.hbm_to_vmem [thread:$0]  %s190, 3072, %s192, [#allocation6], 192, 192, 12
        $region20: #{tpu_custom_call.1} parent=11 // pred_fallthru
          _
        // Predicated region
        $region21: #{tpu_custom_call.1} parent=11 // pred_check
          %p198 = pneg %p110
        $region22: #{tpu_custom_call.1} parent=11 // pred_check_branch
          %200 = sbr.rel (%p198) target = $region24
        $region23: #{tpu_custom_call.1} parent=11 // pred_region
          %202 = vsyncadd [#allocation9], 0
          %s204 = sshll.u32 %s3, 4
          %s205 = int_to_ptr.hbm [resolvable:$true] %s204
          %s206 = sshll.u32 [#allocation8], 4
          %s207 = int_to_ptr.vmem [resolvable:$true] %s206
          %209 = dma.hbm_to_vmem [thread:$0]  %s205, 48, %s207, [#allocation9]
        $region24: #{tpu_custom_call.1} parent=11 // pred_fallthru
          _
      $region12: #{tpu_custom_call.1} parent=5 // pred_fallthru
        _
      %p210 = scmp.lt.s32.totalorder %s21, 2
      // Predicated region
      $region25: #{tpu_custom_call.1} parent=5 // pred_check
        %p211 = pneg %p210
      $region26: #{tpu_custom_call.1} parent=5 // pred_check_branch
        %213 = sbr.rel (%p211) target = $region28
      $region27: #{tpu_custom_call.1} parent=5 // pred_region
        // Predicated region
        $region29: #{tpu_custom_call.1} parent=27 // pred_check
          %p214 = pneg %p41
        $region30: #{tpu_custom_call.1} parent=27 // pred_check_branch
          %216 = sbr.rel (%p214) target = $region32
        $region31: #{tpu_custom_call.1} parent=27 // pred_region
          %s217 = sand.u32 %s31, 1
          %s218 = scalar_lea.sflag [#allocation3], %s217
          %s219 = sand.u32 %s31, 1
          %s220 = smul.addr %s219, 24
          %s221 = scalar_lea.vmem [#allocation2], %s220
          %223 = vsyncadd %s218, 0
          %s224 = smul.addr %s21, 3
          %s225 = smul.addr %s224, 8
          %s226 = scalar_lea.hbm %s0, %s225
          %s228 = sshll.u32 %s226, 4
          %s229 = int_to_ptr.hbm [resolvable:$true] %s228
          %s230 = sshll.u32 %s221, 4
          %s231 = int_to_ptr.vmem [resolvable:$true] %s230
          %233 = dma.hbm_to_vmem [thread:$0]  %s229, 384, %s231, %s218
        $region32: #{tpu_custom_call.1} parent=27 // pred_fallthru
          _
      $region28: #{tpu_custom_call.1} parent=5 // pred_fallthru
        _
      %p234 = scmp.le.s32.totalorder 1, %s21
      %p235 = scmp.lt.s32.totalorder %s21, 3
      %p236 = pnand %p234, %p235
      %p237 = pneg %p236
      // Predicated region
      $region33: #{tpu_custom_call.1} parent=5 // pred_check
        _
      $region34: #{tpu_custom_call.1} parent=5 // pred_check_branch
        %239 = sbr.rel (%p236) target = $region36
      $region35: #{tpu_custom_call.1} parent=5 // pred_region
        %s240 = ssub.s32 %s21, 1
        %s241 = sand.u32 %s34, 1
        %s242 = scalar_lea.sflag [#allocation3], %s241
        %s243 = sand.u32 %s34, 1
        %s244 = smul.addr %s243, 24
        %s245 = scalar_lea.vmem [#allocation2], %s244
        // Predicated region
        $region37: #{tpu_custom_call.1} parent=35 // pred_check
          %p246 = pneg %p47
        $region38: #{tpu_custom_call.1} parent=35 // pred_check_branch
          %248 = sbr.rel (%p246) target = $region40
        $region39: #{tpu_custom_call.1} parent=35 // pred_region
          %250 = dma.done %s242, 384
        $region40: #{tpu_custom_call.1} parent=35 // pred_fallthru
          _
        // Predicated region
        $region41: #{tpu_custom_call.1} parent=35 // pred_check
          %p251 = pneg %p68
        $region42: #{tpu_custom_call.1} parent=35 // pred_check_branch
          %253 = sbr.rel (%p251) target = $region44
        $region43: #{tpu_custom_call.1} parent=35 // pred_region
          %255 = dma.done [#allocation6], 16
        $region44: #{tpu_custom_call.1} parent=35 // pred_fallthru
          _
        // Predicated region
        $region45: #{tpu_custom_call.1} parent=35 // pred_check
          %p256 = pneg %p89
        $region46: #{tpu_custom_call.1} parent=35 // pred_check_branch
          %258 = sbr.rel (%p256) target = $region48
        $region47: #{tpu_custom_call.1} parent=35 // pred_region
          %260 = dma.done [#allocation6], 3072
        $region48: #{tpu_custom_call.1} parent=35 // pred_fallthru
          _
        // Predicated region
        $region49: #{tpu_custom_call.1} parent=35 // pred_check
          %p261 = pneg %p110
        $region50: #{tpu_custom_call.1} parent=35 // pred_check_branch
          %263 = sbr.rel (%p261) target = $region52
        $region51: #{tpu_custom_call.1} parent=35 // pred_region
          %265 = dma.done [#allocation9], 48
        $region52: #{tpu_custom_call.1} parent=35 // pred_fallthru
          _
        %s266 = sand.u32 %s34, 1
        %s267 = scalar_lea.sflag [#allocation3], %s266
        %s268 = sand.u32 %s34, 1
        %s269 = smul.addr %s268, 24
        %s270 = scalar_lea.vmem [#allocation2], %s269
        %p271 = pneg %p47
        %p272 = pneg %p44
        %p273 = pneg %p68
        %p274 = pneg %p65
        %p275 = pneg %p89
        %p276 = pneg %p86
        %p277 = pneg %p110
        %p278 = pneg %p107
        %p279 = pneg %p136
        %p280 = pneg %p133
        %s281 = sand.u32 %s123, 1
        %s282 = scalar_lea.sflag [#allocation4], %s281
        %s283 = sand.u32 %s123, 1
        %s284 = smul.addr %s283, 8
        %s285 = scalar_lea.vmem [#allocation10], %s284
        %p286 = pneg %p157
        %p287 = pneg %p154
        %p288 = scmp.eq.s32.totalorder %s26, 0
        // Predicated region
        $region53: #{tpu_custom_call.1} parent=35 // pred_check
          %p289 = pneg %p288
        $region54: #{tpu_custom_call.1} parent=35 // pred_check_branch
          %291 = sbr.rel (%p289) target = $region56
        $region55: #{tpu_custom_call.1} parent=35 // pred_region
          %v292 = vld [vmem:[#allocation5] sm:$0x1]
          %293 = vst [vmem:[#allocation11] sm:$0x1] %v292
        $region56: #{tpu_custom_call.1} parent=35 // pred_fallthru
          _
        %v294 = vld [vmem:[#allocation8] sm:$0x7]
        %v295 = vld [vmem:[#allocation11] sm:$0x1]
        %v296 = vld [vmem:[%s245] ss:$8 sm:$0x7]
        %v297 = vpack.c.bf16 %v295, %v295
        %v298 = vld [vmem:[#allocation7] sm:$0xff]
        %v299 = vld [vmem:[#allocation7 + $0x8] sm:$0xf]
        %v300 = vld [vmem:[#allocation7 + $0xc] sm:$0xff]
        %v301 = vld [vmem:[#allocation7 + $0x14] sm:$0xf]
        %v302 = vld [vmem:[#allocation7 + $0x18] sm:$0xff]
        %v303 = vld [vmem:[#allocation7 + $0x20] sm:$0xf]
        %v304 = vld [vmem:[#allocation7 + $0x24] sm:$0xff]
        %v305 = vld [vmem:[#allocation7 + $0x2c] sm:$0xf]
        %v306 = vld [vmem:[#allocation7 + $0x30] sm:$0xff]
        %v307 = vld [vmem:[#allocation7 + $0x38] sm:$0xf]
        %v308 = vld [vmem:[#allocation7 + $0x3c] sm:$0xff]
        %v309 = vld [vmem:[#allocation7 + $0x44] sm:$0xf]
        %v310 = vld [vmem:[#allocation7 + $0x48] sm:$0xff]
        %v311 = vld [vmem:[#allocation7 + $0x50] sm:$0xf]
        %v312 = vld [vmem:[#allocation7 + $0x54] sm:$0xff]
        %v313 = vld [vmem:[#allocation7 + $0x5c] sm:$0xf]
        %v314 = vld [vmem:[#allocation7 + $0x60] sm:$0xff]
        %v315 = vld [vmem:[#allocation7 + $0x68] sm:$0xf]
        %v316 = vld [vmem:[#allocation7 + $0x6c] sm:$0xff]
        %v317 = vld [vmem:[#allocation7 + $0x74] sm:$0xf]
        %v318 = vld [vmem:[#allocation7 + $0x78] sm:$0xff]
        %v319 = vld [vmem:[#allocation7 + $0x80] sm:$0xf]
        %v320 = vld [vmem:[#allocation7 + $0x84] sm:$0xff]
        %v321 = vld [vmem:[#allocation7 + $0x8c] sm:$0xf]
        %v322 = vld [vmem:[#allocation7 + $0x90] sm:$0xff]
        %v323 = vld [vmem:[#allocation7 + $0x98] sm:$0xf]
        %v324 = vld [vmem:[#allocation7 + $0x9c] sm:$0xff]
        %v325 = vld [vmem:[#allocation7 + $0xa4] sm:$0xf]
        %v326 = vld [vmem:[#allocation7 + $0xa8] sm:$0xff]
        %v327 = vld [vmem:[#allocation7 + $0xb0] sm:$0xf]
        %v328 = vld [vmem:[#allocation7 + $0xb4] sm:$0xff]
        %v329 = vld [vmem:[#allocation7 + $0xbc] sm:$0xf]
        %v362 = vunpack.c.l.b16 %v298
        %v363 = vunpack.c.h.b16 %v298
        %v364 = vunpack.c.l.b16 %v299
        %v365 = vunpack.c.l.b16 %v300
        %v366 = vunpack.c.h.b16 %v300
        %v367 = vunpack.c.l.b16 %v301
        %v368 = vunpack.c.l.b16 %v302
        %v369 = vunpack.c.h.b16 %v302
        %v370 = vunpack.c.l.b16 %v303
        %v371 = vunpack.c.l.b16 %v304
        %v372 = vunpack.c.h.b16 %v304
        %v373 = vunpack.c.l.b16 %v305
        %v374 = vunpack.c.l.b16 %v306
        %v375 = vunpack.c.h.b16 %v306
        %v376 = vunpack.c.l.b16 %v307
        %v377 = vunpack.c.l.b16 %v308
        %v378 = vunpack.c.h.b16 %v308
        %v379 = vunpack.c.l.b16 %v309
        %v380 = vunpack.c.l.b16 %v310
        %v381 = vunpack.c.h.b16 %v310
        %v382 = vunpack.c.l.b16 %v311
        %v383 = vunpack.c.l.b16 %v312
        %v384 = vunpack.c.h.b16 %v312
        %v385 = vunpack.c.l.b16 %v313
        %v386 = vunpack.c.l.b16 %v314
        %v387 = vunpack.c.h.b16 %v314
        %v388 = vunpack.c.l.b16 %v315
        %v389 = vunpack.c.l.b16 %v316
        %v390 = vunpack.c.h.b16 %v316
        %v391 = vunpack.c.l.b16 %v317
        %v392 = vunpack.c.l.b16 %v318
        %v393 = vunpack.c.h.b16 %v318
        %v394 = vunpack.c.l.b16 %v319
        %v395 = vunpack.c.l.b16 %v320
        %v396 = vunpack.c.h.b16 %v320
        %v397 = vunpack.c.l.b16 %v321
        %v398 = vunpack.c.l.b16 %v322
        %v399 = vunpack.c.h.b16 %v322
        %v400 = vunpack.c.l.b16 %v323
        %v401 = vunpack.c.l.b16 %v324
        %v402 = vunpack.c.h.b16 %v324
        %v403 = vunpack.c.l.b16 %v325
        %v404 = vunpack.c.l.b16 %v326
        %v405 = vunpack.c.h.b16 %v326
        %v406 = vunpack.c.l.b16 %v327
        %v407 = vunpack.c.l.b16 %v328
        %v408 = vunpack.c.h.b16 %v328
        %v409 = vunpack.c.l.b16 %v329
        %v410 = vpack.c.b16 %v365, %v362
        %v411 = vpack.c.b16 %v366, %v363
        %v412 = vpack.c.b16 %v367, %v364
        %v413 = vpack.c.b16 %v371, %v368
        %v414 = vpack.c.b16 %v372, %v369
        %v415 = vpack.c.b16 %v373, %v370
        %v416 = vpack.c.b16 %v377, %v374
        %v417 = vpack.c.b16 %v378, %v375
        %v418 = vpack.c.b16 %v379, %v376
        %v419 = vpack.c.b16 %v383, %v380
        %v420 = vpack.c.b16 %v384, %v381
        %v421 = vpack.c.b16 %v385, %v382
        %v422 = vpack.c.b16 %v389, %v386
        %v423 = vpack.c.b16 %v390, %v387
        %v424 = vpack.c.b16 %v391, %v388
        %v425 = vpack.c.b16 %v395, %v392
        %v426 = vpack.c.b16 %v396, %v393
        %v427 = vpack.c.b16 %v397, %v394
        %v428 = vpack.c.b16 %v401, %v398
        %v429 = vpack.c.b16 %v402, %v399
        %v430 = vpack.c.b16 %v403, %v400
        %v431 = vpack.c.b16 %v407, %v404
        %v432 = vpack.c.b16 %v408, %v405
        %v433 = vpack.c.b16 %v409, %v406
        %v459 = vperm.slane %v294, 0
        %v460 = vperm.slane %v294, 1
        %v461 = vperm.slane %v294, 2
        %465 = vmatpush.bf16.msra.mxu0 %v431
        %466 = vmatpush.bf16.msra.mxu0 %v428
        %467 = vmatpush.bf16.msra.mxu0 %v425
        %468 = vmatpush.bf16.msra.mxu0 %v422
        %469 = vmatpush.bf16.msra.mxu0 %v419
        %470 = vmatpush.bf16.msra.mxu0 %v416
        %471 = vmatpush.bf16.msra.mxu0 %v413
        %472 = vmatpush.bf16.msra.mxu0 %v410
        %473 = vmatmul.bf16.gmra.mxu0 %v297
        %v474 = vpop.f32.mrf.mxu0
        %v475 = vadd.f32 %v459, %v474
        %v476 = vpop.f32.mrf.mxu0
        %477 = vdwg.mxu0
        %478 = vmatpush.bf16.msra.mxu0 %v432
        %479 = vmatpush.bf16.msra.mxu0 %v429
        %480 = vmatpush.bf16.msra.mxu0 %v426
        %481 = vmatpush.bf16.msra.mxu0 %v423
        %482 = vmatpush.bf16.msra.mxu0 %v420
        %483 = vmatpush.bf16.msra.mxu0 %v417
        %484 = vmatpush.bf16.msra.mxu0 %v414
        %485 = vmatpush.bf16.msra.mxu0 %v411
        %486 = vmatmul.bf16.gmra.mxu0 %v297
        %v487 = vpop.f32.mrf.mxu0
        %v488 = vadd.f32 %v460, %v487
        %v489 = vpop.f32.mrf.mxu0
        %490 = vdwg.mxu0
        %491 = vmatpush.bf16.msra.mxu0 %v433
        %492 = vmatpush.bf16.msra.mxu0 %v430
        %493 = vmatpush.bf16.msra.mxu0 %v427
        %494 = vmatpush.bf16.msra.mxu0 %v424
        %495 = vmatpush.bf16.msra.mxu0 %v421
        %496 = vmatpush.bf16.msra.mxu0 %v418
        %497 = vmatpush.bf16.msra.mxu0 %v415
        %498 = vmatpush.bf16.msra.mxu0 %v412
        %499 = vmatmul.bf16.gmra.mxu0 %v297
        %v500 = vpop.f32.mrf.mxu0
        %v501 = vadd.f32 %v461, %v500
        %v502 = vpop.f32.mrf.mxu0
        %503 = vdwg.mxu0
        %v504 = vadd.f32 %v296, %v475
        %v505 = vxor.u32 %v504, 2147483648
        %v506 = vmul.f32 %v505, 1.442695
        %v507 = vpow.pop %v506
        %v508 = vadd.f32 %v507, 1.0
        %v509 = vrcp.pop %v508
        %v510 = vmul.f32 %v508, %v509
        %v511 = vsub.f32 1.0, %v510
        %v512 = vmul.f32 %v509, %v511
        %v513 = vadd.f32 %v509, %v512
        %vm514 = vweird.f32 %v508
        %vm515 = vweird.f32 %v509
        %vm516 = vmor %vm514, %vm515
        %v517 = vsel %vm516, %v509, %v513
        %v518 = vand.u32 2147483647, %v508
        %vm519 = vcmp.eq.f32.partialorder %v518, 8.507059e+37
        %v520 = vand.u32 %v508, 2147483648
        %v521 = vor.u32 1.1754944e-38, %v520
        %v522 = vsel %vm519, %v521, %v517
        %v523 = vmul.f32 1.0, %v522
        %v525 = vrot.slane %v296, 1
        %v527 = vadd.f32 %v525, %v488
        %v528 = vxor.u32 %v527, 2147483648
        %v529 = vmul.f32 %v528, 1.442695
        %v530 = vpow.pop %v529
        %v531 = vadd.f32 %v530, 1.0
        %v532 = vrcp.pop %v531
        %v533 = vmul.f32 %v531, %v532
        %v534 = vsub.f32 1.0, %v533
        %v535 = vmul.f32 %v532, %v534
        %v536 = vadd.f32 %v532, %v535
        %vm537 = vweird.f32 %v531
        %vm538 = vweird.f32 %v532
        %vm539 = vmor %vm537, %vm538
        %v540 = vsel %vm539, %v532, %v536
        %v541 = vand.u32 2147483647, %v531
        %vm542 = vcmp.eq.f32.partialorder %v541, 8.507059e+37
        %v543 = vand.u32 %v531, 2147483648
        %v544 = vor.u32 1.1754944e-38, %v543
        %v545 = vsel %vm542, %v544, %v540
        %v546 = vmul.f32 1.0, %v545
        %v547 = vmul.f32 %v523, %v501
        %v548 = vrot.slane %v296, 2
        %v550 = vadd.f32 %v548, %v547
        %v551 = vtanh.pop %v550
        %v552 = vsub.f32 1.0, %v546
        %v553 = vmul.f32 %v552, %v551
        %v554 = vmul.f32 %v546, %v295
        %v555 = vadd.f32 %v553, %v554
        %556 = vst [vmem:[%s285] sm:$0x1] %v555
        %s557 = scalar_lea.vmem %s245, 1 [#allocation2]
        %v558 = vld [vmem:[%s557] ss:$8 sm:$0x7]
        %v559 = vpack.c.bf16 %v555, %v555
        %v560 = vld [vmem:[#allocation7] sm:$0xff]
        %v561 = vld [vmem:[#allocation7 + $0x8] sm:$0xf]
        %v562 = vld [vmem:[#allocation7 + $0xc] sm:$0xff]
        %v563 = vld [vmem:[#allocation7 + $0x14] sm:$0xf]
        %v564 = vld [vmem:[#allocation7 + $0x18] sm:$0xff]
        %v565 = vld [vmem:[#allocation7 + $0x20] sm:$0xf]
        %v566 = vld [vmem:[#allocation7 + $0x24] sm:$0xff]
        %v567 = vld [vmem:[#allocation7 + $0x2c] sm:$0xf]
        %v568 = vld [vmem:[#allocation7 + $0x30] sm:$0xff]
        %v569 = vld [vmem:[#allocation7 + $0x38] sm:$0xf]
        %v570 = vld [vmem:[#allocation7 + $0x3c] sm:$0xff]
        %v571 = vld [vmem:[#allocation7 + $0x44] sm:$0xf]
        %v572 = vld [vmem:[#allocation7 + $0x48] sm:$0xff]
        %v573 = vld [vmem:[#allocation7 + $0x50] sm:$0xf]
        %v574 = vld [vmem:[#allocation7 + $0x54] sm:$0xff]
        %v575 = vld [vmem:[#allocation7 + $0x5c] sm:$0xf]
        %v576 = vld [vmem:[#allocation7 + $0x60] sm:$0xff]
        %v577 = vld [vmem:[#allocation7 + $0x68] sm:$0xf]
        %v578 = vld [vmem:[#allocation7 + $0x6c] sm:$0xff]
        %v579 = vld [vmem:[#allocation7 + $0x74] sm:$0xf]
        %v580 = vld [vmem:[#allocation7 + $0x78] sm:$0xff]
        %v581 = vld [vmem:[#allocation7 + $0x80] sm:$0xf]
        %v582 = vld [vmem:[#allocation7 + $0x84] sm:$0xff]
        %v583 = vld [vmem:[#allocation7 + $0x8c] sm:$0xf]
        %v584 = vld [vmem:[#allocation7 + $0x90] sm:$0xff]
        %v585 = vld [vmem:[#allocation7 + $0x98] sm:$0xf]
        %v586 = vld [vmem:[#allocation7 + $0x9c] sm:$0xff]
        %v587 = vld [vmem:[#allocation7 + $0xa4] sm:$0xf]
        %v588 = vld [vmem:[#allocation7 + $0xa8] sm:$0xff]
        %v589 = vld [vmem:[#allocation7 + $0xb0] sm:$0xf]
        %v590 = vld [vmem:[#allocation7 + $0xb4] sm:$0xff]
        %v591 = vld [vmem:[#allocation7 + $0xbc] sm:$0xf]
        %v624 = vunpack.c.l.b16 %v560
        %v625 = vunpack.c.h.b16 %v560
        %v626 = vunpack.c.l.b16 %v561
        %v627 = vunpack.c.l.b16 %v562
        %v628 = vunpack.c.h.b16 %v562
        %v629 = vunpack.c.l.b16 %v563
        %v630 = vunpack.c.l.b16 %v564
        %v631 = vunpack.c.h.b16 %v564
        %v632 = vunpack.c.l.b16 %v565
        %v633 = vunpack.c.l.b16 %v566
        %v634 = vunpack.c.h.b16 %v566
        %v635 = vunpack.c.l.b16 %v567
        %v636 = vunpack.c.l.b16 %v568
        %v637 = vunpack.c.h.b16 %v568
        %v638 = vunpack.c.l.b16 %v569
        %v639 = vunpack.c.l.b16 %v570
        %v640 = vunpack.c.h.b16 %v570
        %v641 = vunpack.c.l.b16 %v571
        %v642 = vunpack.c.l.b16 %v572
        %v643 = vunpack.c.h.b16 %v572
        %v644 = vunpack.c.l.b16 %v573
        %v645 = vunpack.c.l.b16 %v574
        %v646 = vunpack.c.h.b16 %v574
        %v647 = vunpack.c.l.b16 %v575
        %v648 = vunpack.c.l.b16 %v576
        %v649 = vunpack.c.h.b16 %v576
        %v650 = vunpack.c.l.b16 %v577
        %v651 = vunpack.c.l.b16 %v578
        %v652 = vunpack.c.h.b16 %v578
        %v653 = vunpack.c.l.b16 %v579
        %v654 = vunpack.c.l.b16 %v580
        %v655 = vunpack.c.h.b16 %v580
        %v656 = vunpack.c.l.b16 %v581
        %v657 = vunpack.c.l.b16 %v582
        %v658 = vunpack.c.h.b16 %v582
        %v659 = vunpack.c.l.b16 %v583
        %v660 = vunpack.c.l.b16 %v584
        %v661 = vunpack.c.h.b16 %v584
        %v662 = vunpack.c.l.b16 %v585
        %v663 = vunpack.c.l.b16 %v586
        %v664 = vunpack.c.h.b16 %v586
        %v665 = vunpack.c.l.b16 %v587
        %v666 = vunpack.c.l.b16 %v588
        %v667 = vunpack.c.h.b16 %v588
        %v668 = vunpack.c.l.b16 %v589
        %v669 = vunpack.c.l.b16 %v590
        %v670 = vunpack.c.h.b16 %v590
        %v671 = vunpack.c.l.b16 %v591
        %v672 = vpack.c.b16 %v627, %v624
        %v673 = vpack.c.b16 %v628, %v625
        %v674 = vpack.c.b16 %v629, %v626
        %v675 = vpack.c.b16 %v633, %v630
        %v676 = vpack.c.b16 %v634, %v631
        %v677 = vpack.c.b16 %v635, %v632
        %v678 = vpack.c.b16 %v639, %v636
        %v679 = vpack.c.b16 %v640, %v637
        %v680 = vpack.c.b16 %v641, %v638
        %v681 = vpack.c.b16 %v645, %v642
        %v682 = vpack.c.b16 %v646, %v643
        %v683 = vpack.c.b16 %v647, %v644
        %v684 = vpack.c.b16 %v651, %v648
        %v685 = vpack.c.b16 %v652, %v649
        %v686 = vpack.c.b16 %v653, %v650
        %v687 = vpack.c.b16 %v657, %v654
        %v688 = vpack.c.b16 %v658, %v655
        %v689 = vpack.c.b16 %v659, %v656
        %v690 = vpack.c.b16 %v663, %v660
        %v691 = vpack.c.b16 %v664, %v661
        %v692 = vpack.c.b16 %v665, %v662
        %v693 = vpack.c.b16 %v669, %v666
        %v694 = vpack.c.b16 %v670, %v667
        %v695 = vpack.c.b16 %v671, %v668
        %720 = vmatpush.bf16.msra.mxu0 %v693
        %721 = vmatpush.bf16.msra.mxu0 %v690
        %722 = vmatpush.bf16.msra.mxu0 %v687
        %723 = vmatpush.bf16.msra.mxu0 %v684
        %724 = vmatpush.bf16.msra.mxu0 %v681
        %725 = vmatpush.bf16.msra.mxu0 %v678
        %726 = vmatpush.bf16.msra.mxu0 %v675
        %727 = vmatpush.bf16.msra.mxu0 %v672
        %728 = vmatmul.bf16.gmra.mxu0 %v559
        %v729 = vpop.f32.mrf.mxu0
        %v730 = vadd.f32 %v459, %v729
        %v731 = vpop.f32.mrf.mxu0
        %732 = vdwg.mxu0
        %733 = vmatpush.bf16.msra.mxu0 %v694
        %734 = vmatpush.bf16.msra.mxu0 %v691
        %735 = vmatpush.bf16.msra.mxu0 %v688
        %736 = vmatpush.bf16.msra.mxu0 %v685
        %737 = vmatpush.bf16.msra.mxu0 %v682
        %738 = vmatpush.bf16.msra.mxu0 %v679
        %739 = vmatpush.bf16.msra.mxu0 %v676
        %740 = vmatpush.bf16.msra.mxu0 %v673
        %741 = vmatmul.bf16.gmra.mxu0 %v559
        %v742 = vpop.f32.mrf.mxu0
        %v743 = vadd.f32 %v460, %v742
        %v744 = vpop.f32.mrf.mxu0
        %745 = vdwg.mxu0
        %746 = vmatpush.bf16.msra.mxu0 %v695
        %747 = vmatpush.bf16.msra.mxu0 %v692
        %748 = vmatpush.bf16.msra.mxu0 %v689
        %749 = vmatpush.bf16.msra.mxu0 %v686
        %750 = vmatpush.bf16.msra.mxu0 %v683
        %751 = vmatpush.bf16.msra.mxu0 %v680
        %752 = vmatpush.bf16.msra.mxu0 %v677
        %753 = vmatpush.bf16.msra.mxu0 %v674
        %754 = vmatmul.bf16.gmra.mxu0 %v559
        %v755 = vpop.f32.mrf.mxu0
        %v756 = vadd.f32 %v461, %v755
        %v757 = vpop.f32.mrf.mxu0
        %758 = vdwg.mxu0
        %v759 = vadd.f32 %v558, %v730
        %v760 = vxor.u32 %v759, 2147483648
        %v761 = vmul.f32 %v760, 1.442695
        %v762 = vpow.pop %v761
        %v763 = vadd.f32 %v762, 1.0
        %v764 = vrcp.pop %v763
        %v765 = vmul.f32 %v763, %v764
        %v766 = vsub.f32 1.0, %v765
        %v767 = vmul.f32 %v764, %v766
        %v768 = vadd.f32 %v764, %v767
        %vm769 = vweird.f32 %v763
        %vm770 = vweird.f32 %v764
        %vm771 = vmor %vm769, %vm770
        %v772 = vsel %vm771, %v764, %v768
        %v773 = vand.u32 2147483647, %v763
        %vm774 = vcmp.eq.f32.partialorder %v773, 8.507059e+37
        %v775 = vand.u32 %v763, 2147483648
        %v776 = vor.u32 1.1754944e-38, %v775
        %v777 = vsel %vm774, %v776, %v772
        %v778 = vmul.f32 1.0, %v777
        %v780 = vrot.slane %v558, 1
        %v782 = vadd.f32 %v780, %v743
        %v783 = vxor.u32 %v782, 2147483648
        %v784 = vmul.f32 %v783, 1.442695
        %v785 = vpow.pop %v784
        %v786 = vadd.f32 %v785, 1.0
        %v787 = vrcp.pop %v786
        %v788 = vmul.f32 %v786, %v787
        %v789 = vsub.f32 1.0, %v788
        %v790 = vmul.f32 %v787, %v789
        %v791 = vadd.f32 %v787, %v790
        %vm792 = vweird.f32 %v786
        %vm793 = vweird.f32 %v787
        %vm794 = vmor %vm792, %vm793
        %v795 = vsel %vm794, %v787, %v791
        %v796 = vand.u32 2147483647, %v786
        %vm797 = vcmp.eq.f32.partialorder %v796, 8.507059e+37
        %v798 = vand.u32 %v786, 2147483648
        %v799 = vor.u32 1.1754944e-38, %v798
        %v800 = vsel %vm797, %v799, %v795
        %v801 = vmul.f32 1.0, %v800
        %v802 = vmul.f32 %v778, %v756
        %v803 = vrot.slane %v558, 2
        %v805 = vadd.f32 %v803, %v802
        %v806 = vtanh.pop %v805
        %v807 = vsub.f32 1.0, %v801
        %v808 = vmul.f32 %v807, %v806
        %v809 = vmul.f32 %v801, %v555
        %v810 = vadd.f32 %v808, %v809
        %811 = vst [vmem:[%s285 + $0x1] sm:$0x1] %v810
        %s812 = scalar_lea.vmem %s245, 2 [#allocation2]
        %v813 = vld [vmem:[%s812] ss:$8 sm:$0x7]
        %v814 = vpack.c.bf16 %v810, %v810
        %v815 = vld [vmem:[#allocation7] sm:$0xff]
        %v816 = vld [vmem:[#allocation7 + $0x8] sm:$0xf]
        %v817 = vld [vmem:[#allocation7 + $0xc] sm:$0xff]
        %v818 = vld [vmem:[#allocation7 + $0x14] sm:$0xf]
        %v819 = vld [vmem:[#allocation7 + $0x18] sm:$0xff]
        %v820 = vld [vmem:[#allocation7 + $0x20] sm:$0xf]
        %v821 = vld [vmem:[#allocation7 + $0x24] sm:$0xff]
        %v822 = vld [vmem:[#allocation7 + $0x2c] sm:$0xf]
        %v823 = vld [vmem:[#allocation7 + $0x30] sm:$0xff]
        %v824 = vld [vmem:[#allocation7 + $0x38] sm:$0xf]
        %v825 = vld [vmem:[#allocation7 + $0x3c] sm:$0xff]
        %v826 = vld [vmem:[#allocation7 + $0x44] sm:$0xf]
        %v827 = vld [vmem:[#allocation7 + $0x48] sm:$0xff]
        %v828 = vld [vmem:[#allocation7 + $0x50] sm:$0xf]
        %v829 = vld [vmem:[#allocation7 + $0x54] sm:$0xff]
        %v830 = vld [vmem:[#allocation7 + $0x5c] sm:$0xf]
        %v831 = vld [vmem:[#allocation7 + $0x60] sm:$0xff]
        %v832 = vld [vmem:[#allocation7 + $0x68] sm:$0xf]
        %v833 = vld [vmem:[#allocation7 + $0x6c] sm:$0xff]
        %v834 = vld [vmem:[#allocation7 + $0x74] sm:$0xf]
        %v835 = vld [vmem:[#allocation7 + $0x78] sm:$0xff]
        %v836 = vld [vmem:[#allocation7 + $0x80] sm:$0xf]
        %v837 = vld [vmem:[#allocation7 + $0x84] sm:$0xff]
        %v838 = vld [vmem:[#allocation7 + $0x8c] sm:$0xf]
        %v839 = vld [vmem:[#allocation7 + $0x90] sm:$0xff]
        %v840 = vld [vmem:[#allocation7 + $0x98] sm:$0xf]
        %v841 = vld [vmem:[#allocation7 + $0x9c] sm:$0xff]
        %v842 = vld [vmem:[#allocation7 + $0xa4] sm:$0xf]
        %v843 = vld [vmem:[#allocation7 + $0xa8] sm:$0xff]
        %v844 = vld [vmem:[#allocation7 + $0xb0] sm:$0xf]
        %v845 = vld [vmem:[#allocation7 + $0xb4] sm:$0xff]
        %v846 = vld [vmem:[#allocation7 + $0xbc] sm:$0xf]
        %v879 = vunpack.c.l.b16 %v815
        %v880 = vunpack.c.h.b16 %v815
        %v881 = vunpack.c.l.b16 %v816
        %v882 = vunpack.c.l.b16 %v817
        %v883 = vunpack.c.h.b16 %v817
        %v884 = vunpack.c.l.b16 %v818
        %v885 = vunpack.c.l.b16 %v819
        %v886 = vunpack.c.h.b16 %v819
        %v887 = vunpack.c.l.b16 %v820
        %v888 = vunpack.c.l.b16 %v821
        %v889 = vunpack.c.h.b16 %v821
        %v890 = vunpack.c.l.b16 %v822
        %v891 = vunpack.c.l.b16 %v823
        %v892 = vunpack.c.h.b16 %v823
        %v893 = vunpack.c.l.b16 %v824
        %v894 = vunpack.c.l.b16 %v825
        %v895 = vunpack.c.h.b16 %v825
        %v896 = vunpack.c.l.b16 %v826
        %v897 = vunpack.c.l.b16 %v827
        %v898 = vunpack.c.h.b16 %v827
        %v899 = vunpack.c.l.b16 %v828
        %v900 = vunpack.c.l.b16 %v829
        %v901 = vunpack.c.h.b16 %v829
        %v902 = vunpack.c.l.b16 %v830
        %v903 = vunpack.c.l.b16 %v831
        %v904 = vunpack.c.h.b16 %v831
        %v905 = vunpack.c.l.b16 %v832
        %v906 = vunpack.c.l.b16 %v833
        %v907 = vunpack.c.h.b16 %v833
        %v908 = vunpack.c.l.b16 %v834
        %v909 = vunpack.c.l.b16 %v835
        %v910 = vunpack.c.h.b16 %v835
        %v911 = vunpack.c.l.b16 %v836
        %v912 = vunpack.c.l.b16 %v837
        %v913 = vunpack.c.h.b16 %v837
        %v914 = vunpack.c.l.b16 %v838
        %v915 = vunpack.c.l.b16 %v839
        %v916 = vunpack.c.h.b16 %v839
        %v917 = vunpack.c.l.b16 %v840
        %v918 = vunpack.c.l.b16 %v841
        %v919 = vunpack.c.h.b16 %v841
        %v920 = vunpack.c.l.b16 %v842
        %v921 = vunpack.c.l.b16 %v843
        %v922 = vunpack.c.h.b16 %v843
        %v923 = vunpack.c.l.b16 %v844
        %v924 = vunpack.c.l.b16 %v845
        %v925 = vunpack.c.h.b16 %v845
        %v926 = vunpack.c.l.b16 %v846
        %v927 = vpack.c.b16 %v882, %v879
        %v928 = vpack.c.b16 %v883, %v880
        %v929 = vpack.c.b16 %v884, %v881
        %v930 = vpack.c.b16 %v888, %v885
        %v931 = vpack.c.b16 %v889, %v886
        %v932 = vpack.c.b16 %v890, %v887
        %v933 = vpack.c.b16 %v894, %v891
        %v934 = vpack.c.b16 %v895, %v892
        %v935 = vpack.c.b16 %v896, %v893
        %v936 = vpack.c.b16 %v900, %v897
        %v937 = vpack.c.b16 %v901, %v898
        %v938 = vpack.c.b16 %v902, %v899
        %v939 = vpack.c.b16 %v906, %v903
        %v940 = vpack.c.b16 %v907, %v904
        %v941 = vpack.c.b16 %v908, %v905
        %v942 = vpack.c.b16 %v912, %v909
        %v943 = vpack.c.b16 %v913, %v910
        %v944 = vpack.c.b16 %v914, %v911
        %v945 = vpack.c.b16 %v918, %v915
        %v946 = vpack.c.b16 %v919, %v916
        %v947 = vpack.c.b16 %v920, %v917
        %v948 = vpack.c.b16 %v924, %v921
        %v949 = vpack.c.b16 %v925, %v922
        %v950 = vpack.c.b16 %v926, %v923
        %975 = vmatpush.bf16.msra.mxu0 %v948
        %976 = vmatpush.bf16.msra.mxu0 %v945
        %977 = vmatpush.bf16.msra.mxu0 %v942
        %978 = vmatpush.bf16.msra.mxu0 %v939
        %979 = vmatpush.bf16.msra.mxu0 %v936
        %980 = vmatpush.bf16.msra.mxu0 %v933
        %981 = vmatpush.bf16.msra.mxu0 %v930
        %982 = vmatpush.bf16.msra.mxu0 %v927
        %983 = vmatmul.bf16.gmra.mxu0 %v814
        %v984 = vpop.f32.mrf.mxu0
        %v985 = vadd.f32 %v459, %v984
        %v986 = vpop.f32.mrf.mxu0
        %987 = vdwg.mxu0
        %988 = vmatpush.bf16.msra.mxu0 %v949
        %989 = vmatpush.bf16.msra.mxu0 %v946
        %990 = vmatpush.bf16.msra.mxu0 %v943
        %991 = vmatpush.bf16.msra.mxu0 %v940
        %992 = vmatpush.bf16.msra.mxu0 %v937
        %993 = vmatpush.bf16.msra.mxu0 %v934
        %994 = vmatpush.bf16.msra.mxu0 %v931
        %995 = vmatpush.bf16.msra.mxu0 %v928
        %996 = vmatmul.bf16.gmra.mxu0 %v814
        %v997 = vpop.f32.mrf.mxu0
        %v998 = vadd.f32 %v460, %v997
        %v999 = vpop.f32.mrf.mxu0
        %1000 = vdwg.mxu0
        %1001 = vmatpush.bf16.msra.mxu0 %v950
        %1002 = vmatpush.bf16.msra.mxu0 %v947
        %1003 = vmatpush.bf16.msra.mxu0 %v944
        %1004 = vmatpush.bf16.msra.mxu0 %v941
        %1005 = vmatpush.bf16.msra.mxu0 %v938
        %1006 = vmatpush.bf16.msra.mxu0 %v935
        %1007 = vmatpush.bf16.msra.mxu0 %v932
        %1008 = vmatpush.bf16.msra.mxu0 %v929
        %1009 = vmatmul.bf16.gmra.mxu0 %v814
        %v1010 = vpop.f32.mrf.mxu0
        %v1011 = vadd.f32 %v461, %v1010
        %v1012 = vpop.f32.mrf.mxu0
        %1013 = vdwg.mxu0
        %v1014 = vadd.f32 %v813, %v985
        %v1015 = vxor.u32 %v1014, 2147483648
        %v1016 = vmul.f32 %v1015, 1.442695
        %v1017 = vpow.pop %v1016
        %v1018 = vadd.f32 %v1017, 1.0
        %v1019 = vrcp.pop %v1018
        %v1020 = vmul.f32 %v1018, %v1019
        %v1021 = vsub.f32 1.0, %v1020
        %v1022 = vmul.f32 %v1019, %v1021
        %v1023 = vadd.f32 %v1019, %v1022
        %vm1024 = vweird.f32 %v1018
        %vm1025 = vweird.f32 %v1019
        %vm1026 = vmor %vm1024, %vm1025
        %v1027 = vsel %vm1026, %v1019, %v1023
        %v1028 = vand.u32 2147483647, %v1018
        %vm1029 = vcmp.eq.f32.partialorder %v1028, 8.507059e+37
        %v1030 = vand.u32 %v1018, 2147483648
        %v1031 = vor.u32 1.1754944e-38, %v1030
        %v1032 = vsel %vm1029, %v1031, %v1027
        %v1033 = vmul.f32 1.0, %v1032
        %v1035 = vrot.slane %v813, 1
        %v1037 = vadd.f32 %v1035, %v998
        %v1038 = vxor.u32 %v1037, 2147483648
        %v1039 = vmul.f32 %v1038, 1.442695
        %v1040 = vpow.pop %v1039
        %v1041 = vadd.f32 %v1040, 1.0
        %v1042 = vrcp.pop %v1041
        %v1043 = vmul.f32 %v1041, %v1042
        %v1044 = vsub.f32 1.0, %v1043
        %v1045 = vmul.f32 %v1042, %v1044
        %v1046 = vadd.f32 %v1042, %v1045
        %vm1047 = vweird.f32 %v1041
        %vm1048 = vweird.f32 %v1042
        %vm1049 = vmor %vm1047, %vm1048
        %v1050 = vsel %vm1049, %v1042, %v1046
        %v1051 = vand.u32 2147483647, %v1041
        %vm1052 = vcmp.eq.f32.partialorder %v1051, 8.507059e+37
        %v1053 = vand.u32 %v1041, 2147483648
        %v1054 = vor.u32 1.1754944e-38, %v1053
        %v1055 = vsel %vm1052, %v1054, %v1050
        %v1056 = vmul.f32 1.0, %v1055
        %v1057 = vmul.f32 %v1033, %v1011
        %v1058 = vrot.slane %v813, 2
        %v1060 = vadd.f32 %v1058, %v1057
        %v1061 = vtanh.pop %v1060
        %v1062 = vsub.f32 1.0, %v1056
        %v1063 = vmul.f32 %v1062, %v1061
        %v1064 = vmul.f32 %v1056, %v810
        %v1065 = vadd.f32 %v1063, %v1064
        %1066 = vst [vmem:[%s285 + $0x2] sm:$0x1] %v1065
        %s1067 = scalar_lea.vmem %s245, 3 [#allocation2]
        %v1068 = vld [vmem:[%s1067] ss:$8 sm:$0x7]
        %v1069 = vpack.c.bf16 %v1065, %v1065
        %v1070 = vld [vmem:[#allocation7] sm:$0xff]
        %v1071 = vld [vmem:[#allocation7 + $0x8] sm:$0xf]
        %v1072 = vld [vmem:[#allocation7 + $0xc] sm:$0xff]
        %v1073 = vld [vmem:[#allocation7 + $0x14] sm:$0xf]
        %v1074 = vld [vmem:[#allocation7 + $0x18] sm:$0xff]
        %v1075 = vld [vmem:[#allocation7 + $0x20] sm:$0xf]
        %v1076 = vld [vmem:[#allocation7 + $0x24] sm:$0xff]
        %v1077 = vld [vmem:[#allocation7 + $0x2c] sm:$0xf]
        %v1078 = vld [vmem:[#allocation7 + $0x30] sm:$0xff]
        %v1079 = vld [vmem:[#allocation7 + $0x38] sm:$0xf]
        %v1080 = vld [vmem:[#allocation7 + $0x3c] sm:$0xff]
        %v1081 = vld [vmem:[#allocation7 + $0x44] sm:$0xf]
        %v1082 = vld [vmem:[#allocation7 + $0x48] sm:$0xff]
        %v1083 = vld [vmem:[#allocation7 + $0x50] sm:$0xf]
        %v1084 = vld [vmem:[#allocation7 + $0x54] sm:$0xff]
        %v1085 = vld [vmem:[#allocation7 + $0x5c] sm:$0xf]
        %v1086 = vld [vmem:[#allocation7 + $0x60] sm:$0xff]
        %v1087 = vld [vmem:[#allocation7 + $0x68] sm:$0xf]
        %v1088 = vld [vmem:[#allocation7 + $0x6c] sm:$0xff]
        %v1089 = vld [vmem:[#allocation7 + $0x74] sm:$0xf]
        %v1090 = vld [vmem:[#allocation7 + $0x78] sm:$0xff]
        %v1091 = vld [vmem:[#allocation7 + $0x80] sm:$0xf]
        %v1092 = vld [vmem:[#allocation7 + $0x84] sm:$0xff]
        %v1093 = vld [vmem:[#allocation7 + $0x8c] sm:$0xf]
        %v1094 = vld [vmem:[#allocation7 + $0x90] sm:$0xff]
        %v1095 = vld [vmem:[#allocation7 + $0x98] sm:$0xf]
        %v1096 = vld [vmem:[#allocation7 + $0x9c] sm:$0xff]
        %v1097 = vld [vmem:[#allocation7 + $0xa4] sm:$0xf]
        %v1098 = vld [vmem:[#allocation7 + $0xa8] sm:$0xff]
        %v1099 = vld [vmem:[#allocation7 + $0xb0] sm:$0xf]
        %v1100 = vld [vmem:[#allocation7 + $0xb4] sm:$0xff]
        %v1101 = vld [vmem:[#allocation7 + $0xbc] sm:$0xf]
        %v1134 = vunpack.c.l.b16 %v1070
        %v1135 = vunpack.c.h.b16 %v1070
        %v1136 = vunpack.c.l.b16 %v1071
        %v1137 = vunpack.c.l.b16 %v1072
        %v1138 = vunpack.c.h.b16 %v1072
        %v1139 = vunpack.c.l.b16 %v1073
        %v1140 = vunpack.c.l.b16 %v1074
        %v1141 = vunpack.c.h.b16 %v1074
        %v1142 = vunpack.c.l.b16 %v1075
        %v1143 = vunpack.c.l.b16 %v1076
        %v1144 = vunpack.c.h.b16 %v1076
        %v1145 = vunpack.c.l.b16 %v1077
        %v1146 = vunpack.c.l.b16 %v1078
        %v1147 = vunpack.c.h.b16 %v1078
        %v1148 = vunpack.c.l.b16 %v1079
        %v1149 = vunpack.c.l.b16 %v1080
        %v1150 = vunpack.c.h.b16 %v1080
        %v1151 = vunpack.c.l.b16 %v1081
        %v1152 = vunpack.c.l.b16 %v1082
        %v1153 = vunpack.c.h.b16 %v1082
        %v1154 = vunpack.c.l.b16 %v1083
        %v1155 = vunpack.c.l.b16 %v1084
        %v1156 = vunpack.c.h.b16 %v1084
        %v1157 = vunpack.c.l.b16 %v1085
        %v1158 = vunpack.c.l.b16 %v1086
        %v1159 = vunpack.c.h.b16 %v1086
        %v1160 = vunpack.c.l.b16 %v1087
        %v1161 = vunpack.c.l.b16 %v1088
        %v1162 = vunpack.c.h.b16 %v1088
        %v1163 = vunpack.c.l.b16 %v1089
        %v1164 = vunpack.c.l.b16 %v1090
        %v1165 = vunpack.c.h.b16 %v1090
        %v1166 = vunpack.c.l.b16 %v1091
        %v1167 = vunpack.c.l.b16 %v1092
        %v1168 = vunpack.c.h.b16 %v1092
        %v1169 = vunpack.c.l.b16 %v1093
        %v1170 = vunpack.c.l.b16 %v1094
        %v1171 = vunpack.c.h.b16 %v1094
        %v1172 = vunpack.c.l.b16 %v1095
        %v1173 = vunpack.c.l.b16 %v1096
        %v1174 = vunpack.c.h.b16 %v1096
        %v1175 = vunpack.c.l.b16 %v1097
        %v1176 = vunpack.c.l.b16 %v1098
        %v1177 = vunpack.c.h.b16 %v1098
        %v1178 = vunpack.c.l.b16 %v1099
        %v1179 = vunpack.c.l.b16 %v1100
        %v1180 = vunpack.c.h.b16 %v1100
        %v1181 = vunpack.c.l.b16 %v1101
        %v1182 = vpack.c.b16 %v1137, %v1134
        %v1183 = vpack.c.b16 %v1138, %v1135
        %v1184 = vpack.c.b16 %v1139, %v1136
        %v1185 = vpack.c.b16 %v1143, %v1140
        %v1186 = vpack.c.b16 %v1144, %v1141
        %v1187 = vpack.c.b16 %v1145, %v1142
        %v1188 = vpack.c.b16 %v1149, %v1146
        %v1189 = vpack.c.b16 %v1150, %v1147
        %v1190 = vpack.c.b16 %v1151, %v1148
        %v1191 = vpack.c.b16 %v1155, %v1152
        %v1192 = vpack.c.b16 %v1156, %v1153
        %v1193 = vpack.c.b16 %v1157, %v1154
        %v1194 = vpack.c.b16 %v1161, %v1158
        %v1195 = vpack.c.b16 %v1162, %v1159
        %v1196 = vpack.c.b16 %v1163, %v1160
        %v1197 = vpack.c.b16 %v1167, %v1164
        %v1198 = vpack.c.b16 %v1168, %v1165
        %v1199 = vpack.c.b16 %v1169, %v1166
        %v1200 = vpack.c.b16 %v1173, %v1170
        %v1201 = vpack.c.b16 %v1174, %v1171
        %v1202 = vpack.c.b16 %v1175, %v1172
        %v1203 = vpack.c.b16 %v1179, %v1176
        %v1204 = vpack.c.b16 %v1180, %v1177
        %v1205 = vpack.c.b16 %v1181, %v1178
        %1230 = vmatpush.bf16.msra.mxu0 %v1203
        %1231 = vmatpush.bf16.msra.mxu0 %v1200
        %1232 = vmatpush.bf16.msra.mxu0 %v1197
        %1233 = vmatpush.bf16.msra.mxu0 %v1194
        %1234 = vmatpush.bf16.msra.mxu0 %v1191
        %1235 = vmatpush.bf16.msra.mxu0 %v1188
        %1236 = vmatpush.bf16.msra.mxu0 %v1185
        %1237 = vmatpush.bf16.msra.mxu0 %v1182
        %1238 = vmatmul.bf16.gmra.mxu0 %v1069
        %v1239 = vpop.f32.mrf.mxu0
        %v1240 = vadd.f32 %v459, %v1239
        %v1241 = vpop.f32.mrf.mxu0
        %1242 = vdwg.mxu0
        %1243 = vmatpush.bf16.msra.mxu0 %v1204
        %1244 = vmatpush.bf16.msra.mxu0 %v1201
        %1245 = vmatpush.bf16.msra.mxu0 %v1198
        %1246 = vmatpush.bf16.msra.mxu0 %v1195
        %1247 = vmatpush.bf16.msra.mxu0 %v1192
        %1248 = vmatpush.bf16.msra.mxu0 %v1189
        %1249 = vmatpush.bf16.msra.mxu0 %v1186
        %1250 = vmatpush.bf16.msra.mxu0 %v1183
        %1251 = vmatmul.bf16.gmra.mxu0 %v1069
        %v1252 = vpop.f32.mrf.mxu0
        %v1253 = vadd.f32 %v460, %v1252
        %v1254 = vpop.f32.mrf.mxu0
        %1255 = vdwg.mxu0
        %1256 = vmatpush.bf16.msra.mxu0 %v1205
        %1257 = vmatpush.bf16.msra.mxu0 %v1202
        %1258 = vmatpush.bf16.msra.mxu0 %v1199
        %1259 = vmatpush.bf16.msra.mxu0 %v1196
        %1260 = vmatpush.bf16.msra.mxu0 %v1193
        %1261 = vmatpush.bf16.msra.mxu0 %v1190
        %1262 = vmatpush.bf16.msra.mxu0 %v1187
        %1263 = vmatpush.bf16.msra.mxu0 %v1184
        %1264 = vmatmul.bf16.gmra.mxu0 %v1069
        %v1265 = vpop.f32.mrf.mxu0
        %v1266 = vadd.f32 %v461, %v1265
        %v1267 = vpop.f32.mrf.mxu0
        %1268 = vdwg.mxu0
        %v1269 = vadd.f32 %v1068, %v1240
        %v1270 = vxor.u32 %v1269, 2147483648
        %v1271 = vmul.f32 %v1270, 1.442695
        %v1272 = vpow.pop %v1271
        %v1273 = vadd.f32 %v1272, 1.0
        %v1274 = vrcp.pop %v1273
        %v1275 = vmul.f32 %v1273, %v1274
        %v1276 = vsub.f32 1.0, %v1275
        %v1277 = vmul.f32 %v1274, %v1276
        %v1278 = vadd.f32 %v1274, %v1277
        %vm1279 = vweird.f32 %v1273
        %vm1280 = vweird.f32 %v1274
        %vm1281 = vmor %vm1279, %vm1280
        %v1282 = vsel %vm1281, %v1274, %v1278
        %v1283 = vand.u32 2147483647, %v1273
        %vm1284 = vcmp.eq.f32.partialorder %v1283, 8.507059e+37
        %v1285 = vand.u32 %v1273, 2147483648
        %v1286 = vor.u32 1.1754944e-38, %v1285
        %v1287 = vsel %vm1284, %v1286, %v1282
        %v1288 = vmul.f32 1.0, %v1287
        %v1290 = vrot.slane %v1068, 1
        %v1292 = vadd.f32 %v1290, %v1253
        %v1293 = vxor.u32 %v1292, 2147483648
        %v1294 = vmul.f32 %v1293, 1.442695
        %v1295 = vpow.pop %v1294
        %v1296 = vadd.f32 %v1295, 1.0
        %v1297 = vrcp.pop %v1296
        %v1298 = vmul.f32 %v1296, %v1297
        %v1299 = vsub.f32 1.0, %v1298
        %v1300 = vmul.f32 %v1297, %v1299
        %v1301 = vadd.f32 %v1297, %v1300
        %vm1302 = vweird.f32 %v1296
        %vm1303 = vweird.f32 %v1297
        %vm1304 = vmor %vm1302, %vm1303
        %v1305 = vsel %vm1304, %v1297, %v1301
        %v1306 = vand.u32 2147483647, %v1296
        %vm1307 = vcmp.eq.f32.partialorder %v1306, 8.507059e+37
        %v1308 = vand.u32 %v1296, 2147483648
        %v1309 = vor.u32 1.1754944e-38, %v1308
        %v1310 = vsel %vm1307, %v1309, %v1305
        %v1311 = vmul.f32 1.0, %v1310
        %v1312 = vmul.f32 %v1288, %v1266
        %v1313 = vrot.slane %v1068, 2
        %v1315 = vadd.f32 %v1313, %v1312
        %v1316 = vtanh.pop %v1315
        %v1317 = vsub.f32 1.0, %v1311
        %v1318 = vmul.f32 %v1317, %v1316
        %v1319 = vmul.f32 %v1311, %v1065
        %v1320 = vadd.f32 %v1318, %v1319
        %1321 = vst [vmem:[%s285 + $0x3] sm:$0x1] %v1320
        %s1322 = scalar_lea.vmem %s245, 4 [#allocation2]
        %v1323 = vld [vmem:[%s1322] ss:$8 sm:$0x7]
        %v1324 = vpack.c.bf16 %v1320, %v1320
        %v1325 = vld [vmem:[#allocation7] sm:$0xff]
        %v1326 = vld [vmem:[#allocation7 + $0x8] sm:$0xf]
        %v1327 = vld [vmem:[#allocation7 + $0xc] sm:$0xff]
        %v1328 = vld [vmem:[#allocation7 + $0x14] sm:$0xf]
        %v1329 = vld [vmem:[#allocation7 + $0x18] sm:$0xff]
        %v1330 = vld [vmem:[#allocation7 + $0x20] sm:$0xf]
        %v1331 = vld [vmem:[#allocation7 + $0x24] sm:$0xff]
        %v1332 = vld [vmem:[#allocation7 + $0x2c] sm:$0xf]
        %v1333 = vld [vmem:[#allocation7 + $0x30] sm:$0xff]
        %v1334 = vld [vmem:[#allocation7 + $0x38] sm:$0xf]
        %v1335 = vld [vmem:[#allocation7 + $0x3c] sm:$0xff]
        %v1336 = vld [vmem:[#allocation7 + $0x44] sm:$0xf]
        %v1337 = vld [vmem:[#allocation7 + $0x48] sm:$0xff]
        %v1338 = vld [vmem:[#allocation7 + $0x50] sm:$0xf]
        %v1339 = vld [vmem:[#allocation7 + $0x54] sm:$0xff]
        %v1340 = vld [vmem:[#allocation7 + $0x5c] sm:$0xf]
        %v1341 = vld [vmem:[#allocation7 + $0x60] sm:$0xff]
        %v1342 = vld [vmem:[#allocation7 + $0x68] sm:$0xf]
        %v1343 = vld [vmem:[#allocation7 + $0x6c] sm:$0xff]
        %v1344 = vld [vmem:[#allocation7 + $0x74] sm:$0xf]
        %v1345 = vld [vmem:[#allocation7 + $0x78] sm:$0xff]
        %v1346 = vld [vmem:[#allocation7 + $0x80] sm:$0xf]
        %v1347 = vld [vmem:[#allocation7 + $0x84] sm:$0xff]
        %v1348 = vld [vmem:[#allocation7 + $0x8c] sm:$0xf]
        %v1349 = vld [vmem:[#allocation7 + $0x90] sm:$0xff]
        %v1350 = vld [vmem:[#allocation7 + $0x98] sm:$0xf]
        %v1351 = vld [vmem:[#allocation7 + $0x9c] sm:$0xff]
        %v1352 = vld [vmem:[#allocation7 + $0xa4] sm:$0xf]
        %v1353 = vld [vmem:[#allocation7 + $0xa8] sm:$0xff]
        %v1354 = vld [vmem:[#allocation7 + $0xb0] sm:$0xf]
        %v1355 = vld [vmem:[#allocation7 + $0xb4] sm:$0xff]
        %v1356 = vld [vmem:[#allocation7 + $0xbc] sm:$0xf]
        %v1389 = vunpack.c.l.b16 %v1325
        %v1390 = vunpack.c.h.b16 %v1325
        %v1391 = vunpack.c.l.b16 %v1326
        %v1392 = vunpack.c.l.b16 %v1327
        %v1393 = vunpack.c.h.b16 %v1327
        %v1394 = vunpack.c.l.b16 %v1328
        %v1395 = vunpack.c.l.b16 %v1329
        %v1396 = vunpack.c.h.b16 %v1329
        %v1397 = vunpack.c.l.b16 %v1330
        %v1398 = vunpack.c.l.b16 %v1331
        %v1399 = vunpack.c.h.b16 %v1331
        %v1400 = vunpack.c.l.b16 %v1332
        %v1401 = vunpack.c.l.b16 %v1333
        %v1402 = vunpack.c.h.b16 %v1333
        %v1403 = vunpack.c.l.b16 %v1334
        %v1404 = vunpack.c.l.b16 %v1335
        %v1405 = vunpack.c.h.b16 %v1335
        %v1406 = vunpack.c.l.b16 %v1336
        %v1407 = vunpack.c.l.b16 %v1337
        %v1408 = vunpack.c.h.b16 %v1337
        %v1409 = vunpack.c.l.b16 %v1338
        %v1410 = vunpack.c.l.b16 %v1339
        %v1411 = vunpack.c.h.b16 %v1339
        %v1412 = vunpack.c.l.b16 %v1340
        %v1413 = vunpack.c.l.b16 %v1341
        %v1414 = vunpack.c.h.b16 %v1341
        %v1415 = vunpack.c.l.b16 %v1342
        %v1416 = vunpack.c.l.b16 %v1343
        %v1417 = vunpack.c.h.b16 %v1343
        %v1418 = vunpack.c.l.b16 %v1344
        %v1419 = vunpack.c.l.b16 %v1345
        %v1420 = vunpack.c.h.b16 %v1345
        %v1421 = vunpack.c.l.b16 %v1346
        %v1422 = vunpack.c.l.b16 %v1347
        %v1423 = vunpack.c.h.b16 %v1347
        %v1424 = vunpack.c.l.b16 %v1348
        %v1425 = vunpack.c.l.b16 %v1349
        %v1426 = vunpack.c.h.b16 %v1349
        %v1427 = vunpack.c.l.b16 %v1350
        %v1428 = vunpack.c.l.b16 %v1351
        %v1429 = vunpack.c.h.b16 %v1351
        %v1430 = vunpack.c.l.b16 %v1352
        %v1431 = vunpack.c.l.b16 %v1353
        %v1432 = vunpack.c.h.b16 %v1353
        %v1433 = vunpack.c.l.b16 %v1354
        %v1434 = vunpack.c.l.b16 %v1355
        %v1435 = vunpack.c.h.b16 %v1355
        %v1436 = vunpack.c.l.b16 %v1356
        %v1437 = vpack.c.b16 %v1392, %v1389
        %v1438 = vpack.c.b16 %v1393, %v1390
        %v1439 = vpack.c.b16 %v1394, %v1391
        %v1440 = vpack.c.b16 %v1398, %v1395
        %v1441 = vpack.c.b16 %v1399, %v1396
        %v1442 = vpack.c.b16 %v1400, %v1397
        %v1443 = vpack.c.b16 %v1404, %v1401
        %v1444 = vpack.c.b16 %v1405, %v1402
        %v1445 = vpack.c.b16 %v1406, %v1403
        %v1446 = vpack.c.b16 %v1410, %v1407
        %v1447 = vpack.c.b16 %v1411, %v1408
        %v1448 = vpack.c.b16 %v1412, %v1409
        %v1449 = vpack.c.b16 %v1416, %v1413
        %v1450 = vpack.c.b16 %v1417, %v1414
        %v1451 = vpack.c.b16 %v1418, %v1415
        %v1452 = vpack.c.b16 %v1422, %v1419
        %v1453 = vpack.c.b16 %v1423, %v1420
        %v1454 = vpack.c.b16 %v1424, %v1421
        %v1455 = vpack.c.b16 %v1428, %v1425
        %v1456 = vpack.c.b16 %v1429, %v1426
        %v1457 = vpack.c.b16 %v1430, %v1427
        %v1458 = vpack.c.b16 %v1434, %v1431
        %v1459 = vpack.c.b16 %v1435, %v1432
        %v1460 = vpack.c.b16 %v1436, %v1433
        %1485 = vmatpush.bf16.msra.mxu0 %v1458
        %1486 = vmatpush.bf16.msra.mxu0 %v1455
        %1487 = vmatpush.bf16.msra.mxu0 %v1452
        %1488 = vmatpush.bf16.msra.mxu0 %v1449
        %1489 = vmatpush.bf16.msra.mxu0 %v1446
        %1490 = vmatpush.bf16.msra.mxu0 %v1443
        %1491 = vmatpush.bf16.msra.mxu0 %v1440
        %1492 = vmatpush.bf16.msra.mxu0 %v1437
        %1493 = vmatmul.bf16.gmra.mxu0 %v1324
        %v1494 = vpop.f32.mrf.mxu0
        %v1495 = vadd.f32 %v459, %v1494
        %v1496 = vpop.f32.mrf.mxu0
        %1497 = vdwg.mxu0
        %1498 = vmatpush.bf16.msra.mxu0 %v1459
        %1499 = vmatpush.bf16.msra.mxu0 %v1456
        %1500 = vmatpush.bf16.msra.mxu0 %v1453
        %1501 = vmatpush.bf16.msra.mxu0 %v1450
        %1502 = vmatpush.bf16.msra.mxu0 %v1447
        %1503 = vmatpush.bf16.msra.mxu0 %v1444
        %1504 = vmatpush.bf16.msra.mxu0 %v1441
        %1505 = vmatpush.bf16.msra.mxu0 %v1438
        %1506 = vmatmul.bf16.gmra.mxu0 %v1324
        %v1507 = vpop.f32.mrf.mxu0
        %v1508 = vadd.f32 %v460, %v1507
        %v1509 = vpop.f32.mrf.mxu0
        %1510 = vdwg.mxu0
        %1511 = vmatpush.bf16.msra.mxu0 %v1460
        %1512 = vmatpush.bf16.msra.mxu0 %v1457
        %1513 = vmatpush.bf16.msra.mxu0 %v1454
        %1514 = vmatpush.bf16.msra.mxu0 %v1451
        %1515 = vmatpush.bf16.msra.mxu0 %v1448
        %1516 = vmatpush.bf16.msra.mxu0 %v1445
        %1517 = vmatpush.bf16.msra.mxu0 %v1442
        %1518 = vmatpush.bf16.msra.mxu0 %v1439
        %1519 = vmatmul.bf16.gmra.mxu0 %v1324
        %v1520 = vpop.f32.mrf.mxu0
        %v1521 = vadd.f32 %v461, %v1520
        %v1522 = vpop.f32.mrf.mxu0
        %1523 = vdwg.mxu0
        %v1524 = vadd.f32 %v1323, %v1495
        %v1525 = vxor.u32 %v1524, 2147483648
        %v1526 = vmul.f32 %v1525, 1.442695
        %v1527 = vpow.pop %v1526
        %v1528 = vadd.f32 %v1527, 1.0
        %v1529 = vrcp.pop %v1528
        %v1530 = vmul.f32 %v1528, %v1529
        %v1531 = vsub.f32 1.0, %v1530
        %v1532 = vmul.f32 %v1529, %v1531
        %v1533 = vadd.f32 %v1529, %v1532
        %vm1534 = vweird.f32 %v1528
        %vm1535 = vweird.f32 %v1529
        %vm1536 = vmor %vm1534, %vm1535
        %v1537 = vsel %vm1536, %v1529, %v1533
        %v1538 = vand.u32 2147483647, %v1528
        %vm1539 = vcmp.eq.f32.partialorder %v1538, 8.507059e+37
        %v1540 = vand.u32 %v1528, 2147483648
        %v1541 = vor.u32 1.1754944e-38, %v1540
        %v1542 = vsel %vm1539, %v1541, %v1537
        %v1543 = vmul.f32 1.0, %v1542
        %v1545 = vrot.slane %v1323, 1
        %v1547 = vadd.f32 %v1545, %v1508
        %v1548 = vxor.u32 %v1547, 2147483648
        %v1549 = vmul.f32 %v1548, 1.442695
        %v1550 = vpow.pop %v1549
        %v1551 = vadd.f32 %v1550, 1.0
        %v1552 = vrcp.pop %v1551
        %v1553 = vmul.f32 %v1551, %v1552
        %v1554 = vsub.f32 1.0, %v1553
        %v1555 = vmul.f32 %v1552, %v1554
        %v1556 = vadd.f32 %v1552, %v1555
        %vm1557 = vweird.f32 %v1551
        %vm1558 = vweird.f32 %v1552
        %vm1559 = vmor %vm1557, %vm1558
        %v1560 = vsel %vm1559, %v1552, %v1556
        %v1561 = vand.u32 2147483647, %v1551
        %vm1562 = vcmp.eq.f32.partialorder %v1561, 8.507059e+37
        %v1563 = vand.u32 %v1551, 2147483648
        %v1564 = vor.u32 1.1754944e-38, %v1563
        %v1565 = vsel %vm1562, %v1564, %v1560
        %v1566 = vmul.f32 1.0, %v1565
        %v1567 = vmul.f32 %v1543, %v1521
        %v1568 = vrot.slane %v1323, 2
        %v1570 = vadd.f32 %v1568, %v1567
        %v1571 = vtanh.pop %v1570
        %v1572 = vsub.f32 1.0, %v1566
        %v1573 = vmul.f32 %v1572, %v1571
        %v1574 = vmul.f32 %v1566, %v1320
        %v1575 = vadd.f32 %v1573, %v1574
        %1576 = vst [vmem:[%s285 + $0x4] sm:$0x1] %v1575
        %s1577 = scalar_lea.vmem %s245, 5 [#allocation2]
        %v1578 = vld [vmem:[%s1577] ss:$8 sm:$0x7]
        %v1579 = vpack.c.bf16 %v1575, %v1575
        %v1580 = vld [vmem:[#allocation7] sm:$0xff]
        %v1581 = vld [vmem:[#allocation7 + $0x8] sm:$0xf]
        %v1582 = vld [vmem:[#allocation7 + $0xc] sm:$0xff]
        %v1583 = vld [vmem:[#allocation7 + $0x14] sm:$0xf]
        %v1584 = vld [vmem:[#allocation7 + $0x18] sm:$0xff]
        %v1585 = vld [vmem:[#allocation7 + $0x20] sm:$0xf]
        %v1586 = vld [vmem:[#allocation7 + $0x24] sm:$0xff]
        %v1587 = vld [vmem:[#allocation7 + $0x2c] sm:$0xf]
        %v1588 = vld [vmem:[#allocation7 + $0x30] sm:$0xff]
        %v1589 = vld [vmem:[#allocation7 + $0x38] sm:$0xf]
        %v1590 = vld [vmem:[#allocation7 + $0x3c] sm:$0xff]
        %v1591 = vld [vmem:[#allocation7 + $0x44] sm:$0xf]
        %v1592 = vld [vmem:[#allocation7 + $0x48] sm:$0xff]
        %v1593 = vld [vmem:[#allocation7 + $0x50] sm:$0xf]
        %v1594 = vld [vmem:[#allocation7 + $0x54] sm:$0xff]
        %v1595 = vld [vmem:[#allocation7 + $0x5c] sm:$0xf]
        %v1596 = vld [vmem:[#allocation7 + $0x60] sm:$0xff]
        %v1597 = vld [vmem:[#allocation7 + $0x68] sm:$0xf]
        %v1598 = vld [vmem:[#allocation7 + $0x6c] sm:$0xff]
        %v1599 = vld [vmem:[#allocation7 + $0x74] sm:$0xf]
        %v1600 = vld [vmem:[#allocation7 + $0x78] sm:$0xff]
        %v1601 = vld [vmem:[#allocation7 + $0x80] sm:$0xf]
        %v1602 = vld [vmem:[#allocation7 + $0x84] sm:$0xff]
        %v1603 = vld [vmem:[#allocation7 + $0x8c] sm:$0xf]
        %v1604 = vld [vmem:[#allocation7 + $0x90] sm:$0xff]
        %v1605 = vld [vmem:[#allocation7 + $0x98] sm:$0xf]
        %v1606 = vld [vmem:[#allocation7 + $0x9c] sm:$0xff]
        %v1607 = vld [vmem:[#allocation7 + $0xa4] sm:$0xf]
        %v1608 = vld [vmem:[#allocation7 + $0xa8] sm:$0xff]
        %v1609 = vld [vmem:[#allocation7 + $0xb0] sm:$0xf]
        %v1610 = vld [vmem:[#allocation7 + $0xb4] sm:$0xff]
        %v1611 = vld [vmem:[#allocation7 + $0xbc] sm:$0xf]
        %v1644 = vunpack.c.l.b16 %v1580
        %v1645 = vunpack.c.h.b16 %v1580
        %v1646 = vunpack.c.l.b16 %v1581
        %v1647 = vunpack.c.l.b16 %v1582
        %v1648 = vunpack.c.h.b16 %v1582
        %v1649 = vunpack.c.l.b16 %v1583
        %v1650 = vunpack.c.l.b16 %v1584
        %v1651 = vunpack.c.h.b16 %v1584
        %v1652 = vunpack.c.l.b16 %v1585
        %v1653 = vunpack.c.l.b16 %v1586
        %v1654 = vunpack.c.h.b16 %v1586
        %v1655 = vunpack.c.l.b16 %v1587
        %v1656 = vunpack.c.l.b16 %v1588
        %v1657 = vunpack.c.h.b16 %v1588
        %v1658 = vunpack.c.l.b16 %v1589
        %v1659 = vunpack.c.l.b16 %v1590
        %v1660 = vunpack.c.h.b16 %v1590
        %v1661 = vunpack.c.l.b16 %v1591
        %v1662 = vunpack.c.l.b16 %v1592
        %v1663 = vunpack.c.h.b16 %v1592
        %v1664 = vunpack.c.l.b16 %v1593
        %v1665 = vunpack.c.l.b16 %v1594
        %v1666 = vunpack.c.h.b16 %v1594
        %v1667 = vunpack.c.l.b16 %v1595
        %v1668 = vunpack.c.l.b16 %v1596
        %v1669 = vunpack.c.h.b16 %v1596
        %v1670 = vunpack.c.l.b16 %v1597
        %v1671 = vunpack.c.l.b16 %v1598
        %v1672 = vunpack.c.h.b16 %v1598
        %v1673 = vunpack.c.l.b16 %v1599
        %v1674 = vunpack.c.l.b16 %v1600
        %v1675 = vunpack.c.h.b16 %v1600
        %v1676 = vunpack.c.l.b16 %v1601
        %v1677 = vunpack.c.l.b16 %v1602
        %v1678 = vunpack.c.h.b16 %v1602
        %v1679 = vunpack.c.l.b16 %v1603
        %v1680 = vunpack.c.l.b16 %v1604
        %v1681 = vunpack.c.h.b16 %v1604
        %v1682 = vunpack.c.l.b16 %v1605
        %v1683 = vunpack.c.l.b16 %v1606
        %v1684 = vunpack.c.h.b16 %v1606
        %v1685 = vunpack.c.l.b16 %v1607
        %v1686 = vunpack.c.l.b16 %v1608
        %v1687 = vunpack.c.h.b16 %v1608
        %v1688 = vunpack.c.l.b16 %v1609
        %v1689 = vunpack.c.l.b16 %v1610
        %v1690 = vunpack.c.h.b16 %v1610
        %v1691 = vunpack.c.l.b16 %v1611
        %v1692 = vpack.c.b16 %v1647, %v1644
        %v1693 = vpack.c.b16 %v1648, %v1645
        %v1694 = vpack.c.b16 %v1649, %v1646
        %v1695 = vpack.c.b16 %v1653, %v1650
        %v1696 = vpack.c.b16 %v1654, %v1651
        %v1697 = vpack.c.b16 %v1655, %v1652
        %v1698 = vpack.c.b16 %v1659, %v1656
        %v1699 = vpack.c.b16 %v1660, %v1657
        %v1700 = vpack.c.b16 %v1661, %v1658
        %v1701 = vpack.c.b16 %v1665, %v1662
        %v1702 = vpack.c.b16 %v1666, %v1663
        %v1703 = vpack.c.b16 %v1667, %v1664
        %v1704 = vpack.c.b16 %v1671, %v1668
        %v1705 = vpack.c.b16 %v1672, %v1669
        %v1706 = vpack.c.b16 %v1673, %v1670
        %v1707 = vpack.c.b16 %v1677, %v1674
        %v1708 = vpack.c.b16 %v1678, %v1675
        %v1709 = vpack.c.b16 %v1679, %v1676
        %v1710 = vpack.c.b16 %v1683, %v1680
        %v1711 = vpack.c.b16 %v1684, %v1681
        %v1712 = vpack.c.b16 %v1685, %v1682
        %v1713 = vpack.c.b16 %v1689, %v1686
        %v1714 = vpack.c.b16 %v1690, %v1687
        %v1715 = vpack.c.b16 %v1691, %v1688
        %1740 = vmatpush.bf16.msra.mxu0 %v1713
        %1741 = vmatpush.bf16.msra.mxu0 %v1710
        %1742 = vmatpush.bf16.msra.mxu0 %v1707
        %1743 = vmatpush.bf16.msra.mxu0 %v1704
        %1744 = vmatpush.bf16.msra.mxu0 %v1701
        %1745 = vmatpush.bf16.msra.mxu0 %v1698
        %1746 = vmatpush.bf16.msra.mxu0 %v1695
        %1747 = vmatpush.bf16.msra.mxu0 %v1692
        %1748 = vmatmul.bf16.gmra.mxu0 %v1579
        %v1749 = vpop.f32.mrf.mxu0
        %v1750 = vadd.f32 %v459, %v1749
        %v1751 = vpop.f32.mrf.mxu0
        %1752 = vdwg.mxu0
        %1753 = vmatpush.bf16.msra.mxu0 %v1714
        %1754 = vmatpush.bf16.msra.mxu0 %v1711
        %1755 = vmatpush.bf16.msra.mxu0 %v1708
        %1756 = vmatpush.bf16.msra.mxu0 %v1705
        %1757 = vmatpush.bf16.msra.mxu0 %v1702
        %1758 = vmatpush.bf16.msra.mxu0 %v1699
        %1759 = vmatpush.bf16.msra.mxu0 %v1696
        %1760 = vmatpush.bf16.msra.mxu0 %v1693
        %1761 = vmatmul.bf16.gmra.mxu0 %v1579
        %v1762 = vpop.f32.mrf.mxu0
        %v1763 = vadd.f32 %v460, %v1762
        %v1764 = vpop.f32.mrf.mxu0
        %1765 = vdwg.mxu0
        %1766 = vmatpush.bf16.msra.mxu0 %v1715
        %1767 = vmatpush.bf16.msra.mxu0 %v1712
        %1768 = vmatpush.bf16.msra.mxu0 %v1709
        %1769 = vmatpush.bf16.msra.mxu0 %v1706
        %1770 = vmatpush.bf16.msra.mxu0 %v1703
        %1771 = vmatpush.bf16.msra.mxu0 %v1700
        %1772 = vmatpush.bf16.msra.mxu0 %v1697
        %1773 = vmatpush.bf16.msra.mxu0 %v1694
        %1774 = vmatmul.bf16.gmra.mxu0 %v1579
        %v1775 = vpop.f32.mrf.mxu0
        %v1776 = vadd.f32 %v461, %v1775
        %v1777 = vpop.f32.mrf.mxu0
        %1778 = vdwg.mxu0
        %v1779 = vadd.f32 %v1578, %v1750
        %v1780 = vxor.u32 %v1779, 2147483648
        %v1781 = vmul.f32 %v1780, 1.442695
        %v1782 = vpow.pop %v1781
        %v1783 = vadd.f32 %v1782, 1.0
        %v1784 = vrcp.pop %v1783
        %v1785 = vmul.f32 %v1783, %v1784
        %v1786 = vsub.f32 1.0, %v1785
        %v1787 = vmul.f32 %v1784, %v1786
        %v1788 = vadd.f32 %v1784, %v1787
        %vm1789 = vweird.f32 %v1783
        %vm1790 = vweird.f32 %v1784
        %vm1791 = vmor %vm1789, %vm1790
        %v1792 = vsel %vm1791, %v1784, %v1788
        %v1793 = vand.u32 2147483647, %v1783
        %vm1794 = vcmp.eq.f32.partialorder %v1793, 8.507059e+37
        %v1795 = vand.u32 %v1783, 2147483648
        %v1796 = vor.u32 1.1754944e-38, %v1795
        %v1797 = vsel %vm1794, %v1796, %v1792
        %v1798 = vmul.f32 1.0, %v1797
        %v1800 = vrot.slane %v1578, 1
        %v1802 = vadd.f32 %v1800, %v1763
        %v1803 = vxor.u32 %v1802, 2147483648
        %v1804 = vmul.f32 %v1803, 1.442695
        %v1805 = vpow.pop %v1804
        %v1806 = vadd.f32 %v1805, 1.0
        %v1807 = vrcp.pop %v1806
        %v1808 = vmul.f32 %v1806, %v1807
        %v1809 = vsub.f32 1.0, %v1808
        %v1810 = vmul.f32 %v1807, %v1809
        %v1811 = vadd.f32 %v1807, %v1810
        %vm1812 = vweird.f32 %v1806
        %vm1813 = vweird.f32 %v1807
        %vm1814 = vmor %vm1812, %vm1813
        %v1815 = vsel %vm1814, %v1807, %v1811
        %v1816 = vand.u32 2147483647, %v1806
        %vm1817 = vcmp.eq.f32.partialorder %v1816, 8.507059e+37
        %v1818 = vand.u32 %v1806, 2147483648
        %v1819 = vor.u32 1.1754944e-38, %v1818
        %v1820 = vsel %vm1817, %v1819, %v1815
        %v1821 = vmul.f32 1.0, %v1820
        %v1822 = vmul.f32 %v1798, %v1776
        %v1823 = vrot.slane %v1578, 2
        %v1825 = vadd.f32 %v1823, %v1822
        %v1826 = vtanh.pop %v1825
        %v1827 = vsub.f32 1.0, %v1821
        %v1828 = vmul.f32 %v1827, %v1826
        %v1829 = vmul.f32 %v1821, %v1575
        %v1830 = vadd.f32 %v1828, %v1829
        %1831 = vst [vmem:[%s285 + $0x5] sm:$0x1] %v1830
        %s1832 = scalar_lea.vmem %s245, 6 [#allocation2]
        %v1833 = vld [vmem:[%s1832] ss:$8 sm:$0x7]
        %v1834 = vpack.c.bf16 %v1830, %v1830
        %v1835 = vld [vmem:[#allocation7] sm:$0xff]
        %v1836 = vld [vmem:[#allocation7 + $0x8] sm:$0xf]
        %v1837 = vld [vmem:[#allocation7 + $0xc] sm:$0xff]
        %v1838 = vld [vmem:[#allocation7 + $0x14] sm:$0xf]
        %v1839 = vld [vmem:[#allocation7 + $0x18] sm:$0xff]
        %v1840 = vld [vmem:[#allocation7 + $0x20] sm:$0xf]
        %v1841 = vld [vmem:[#allocation7 + $0x24] sm:$0xff]
        %v1842 = vld [vmem:[#allocation7 + $0x2c] sm:$0xf]
        %v1843 = vld [vmem:[#allocation7 + $0x30] sm:$0xff]
        %v1844 = vld [vmem:[#allocation7 + $0x38] sm:$0xf]
        %v1845 = vld [vmem:[#allocation7 + $0x3c] sm:$0xff]
        %v1846 = vld [vmem:[#allocation7 + $0x44] sm:$0xf]
        %v1847 = vld [vmem:[#allocation7 + $0x48] sm:$0xff]
        %v1848 = vld [vmem:[#allocation7 + $0x50] sm:$0xf]
        %v1849 = vld [vmem:[#allocation7 + $0x54] sm:$0xff]
        %v1850 = vld [vmem:[#allocation7 + $0x5c] sm:$0xf]
        %v1851 = vld [vmem:[#allocation7 + $0x60] sm:$0xff]
        %v1852 = vld [vmem:[#allocation7 + $0x68] sm:$0xf]
        %v1853 = vld [vmem:[#allocation7 + $0x6c] sm:$0xff]
        %v1854 = vld [vmem:[#allocation7 + $0x74] sm:$0xf]
        %v1855 = vld [vmem:[#allocation7 + $0x78] sm:$0xff]
        %v1856 = vld [vmem:[#allocation7 + $0x80] sm:$0xf]
        %v1857 = vld [vmem:[#allocation7 + $0x84] sm:$0xff]
        %v1858 = vld [vmem:[#allocation7 + $0x8c] sm:$0xf]
        %v1859 = vld [vmem:[#allocation7 + $0x90] sm:$0xff]
        %v1860 = vld [vmem:[#allocation7 + $0x98] sm:$0xf]
        %v1861 = vld [vmem:[#allocation7 + $0x9c] sm:$0xff]
        %v1862 = vld [vmem:[#allocation7 + $0xa4] sm:$0xf]
        %v1863 = vld [vmem:[#allocation7 + $0xa8] sm:$0xff]
        %v1864 = vld [vmem:[#allocation7 + $0xb0] sm:$0xf]
        %v1865 = vld [vmem:[#allocation7 + $0xb4] sm:$0xff]
        %v1866 = vld [vmem:[#allocation7 + $0xbc] sm:$0xf]
        %v1899 = vunpack.c.l.b16 %v1835
        %v1900 = vunpack.c.h.b16 %v1835
        %v1901 = vunpack.c.l.b16 %v1836
        %v1902 = vunpack.c.l.b16 %v1837
        %v1903 = vunpack.c.h.b16 %v1837
        %v1904 = vunpack.c.l.b16 %v1838
        %v1905 = vunpack.c.l.b16 %v1839
        %v1906 = vunpack.c.h.b16 %v1839
        %v1907 = vunpack.c.l.b16 %v1840
        %v1908 = vunpack.c.l.b16 %v1841
        %v1909 = vunpack.c.h.b16 %v1841
        %v1910 = vunpack.c.l.b16 %v1842
        %v1911 = vunpack.c.l.b16 %v1843
        %v1912 = vunpack.c.h.b16 %v1843
        %v1913 = vunpack.c.l.b16 %v1844
        %v1914 = vunpack.c.l.b16 %v1845
        %v1915 = vunpack.c.h.b16 %v1845
        %v1916 = vunpack.c.l.b16 %v1846
        %v1917 = vunpack.c.l.b16 %v1847
        %v1918 = vunpack.c.h.b16 %v1847
        %v1919 = vunpack.c.l.b16 %v1848
        %v1920 = vunpack.c.l.b16 %v1849
        %v1921 = vunpack.c.h.b16 %v1849
        %v1922 = vunpack.c.l.b16 %v1850
        %v1923 = vunpack.c.l.b16 %v1851
        %v1924 = vunpack.c.h.b16 %v1851
        %v1925 = vunpack.c.l.b16 %v1852
        %v1926 = vunpack.c.l.b16 %v1853
        %v1927 = vunpack.c.h.b16 %v1853
        %v1928 = vunpack.c.l.b16 %v1854
        %v1929 = vunpack.c.l.b16 %v1855
        %v1930 = vunpack.c.h.b16 %v1855
        %v1931 = vunpack.c.l.b16 %v1856
        %v1932 = vunpack.c.l.b16 %v1857
        %v1933 = vunpack.c.h.b16 %v1857
        %v1934 = vunpack.c.l.b16 %v1858
        %v1935 = vunpack.c.l.b16 %v1859
        %v1936 = vunpack.c.h.b16 %v1859
        %v1937 = vunpack.c.l.b16 %v1860
        %v1938 = vunpack.c.l.b16 %v1861
        %v1939 = vunpack.c.h.b16 %v1861
        %v1940 = vunpack.c.l.b16 %v1862
        %v1941 = vunpack.c.l.b16 %v1863
        %v1942 = vunpack.c.h.b16 %v1863
        %v1943 = vunpack.c.l.b16 %v1864
        %v1944 = vunpack.c.l.b16 %v1865
        %v1945 = vunpack.c.h.b16 %v1865
        %v1946 = vunpack.c.l.b16 %v1866
        %v1947 = vpack.c.b16 %v1902, %v1899
        %v1948 = vpack.c.b16 %v1903, %v1900
        %v1949 = vpack.c.b16 %v1904, %v1901
        %v1950 = vpack.c.b16 %v1908, %v1905
        %v1951 = vpack.c.b16 %v1909, %v1906
        %v1952 = vpack.c.b16 %v1910, %v1907
        %v1953 = vpack.c.b16 %v1914, %v1911
        %v1954 = vpack.c.b16 %v1915, %v1912
        %v1955 = vpack.c.b16 %v1916, %v1913
        %v1956 = vpack.c.b16 %v1920, %v1917
        %v1957 = vpack.c.b16 %v1921, %v1918
        %v1958 = vpack.c.b16 %v1922, %v1919
        %v1959 = vpack.c.b16 %v1926, %v1923
        %v1960 = vpack.c.b16 %v1927, %v1924
        %v1961 = vpack.c.b16 %v1928, %v1925
        %v1962 = vpack.c.b16 %v1932, %v1929
        %v1963 = vpack.c.b16 %v1933, %v1930
        %v1964 = vpack.c.b16 %v1934, %v1931
        %v1965 = vpack.c.b16 %v1938, %v1935
        %v1966 = vpack.c.b16 %v1939, %v1936
        %v1967 = vpack.c.b16 %v1940, %v1937
        %v1968 = vpack.c.b16 %v1944, %v1941
        %v1969 = vpack.c.b16 %v1945, %v1942
        %v1970 = vpack.c.b16 %v1946, %v1943
        %1995 = vmatpush.bf16.msra.mxu0 %v1968
        %1996 = vmatpush.bf16.msra.mxu0 %v1965
        %1997 = vmatpush.bf16.msra.mxu0 %v1962
        %1998 = vmatpush.bf16.msra.mxu0 %v1959
        %1999 = vmatpush.bf16.msra.mxu0 %v1956
        %2000 = vmatpush.bf16.msra.mxu0 %v1953
        %2001 = vmatpush.bf16.msra.mxu0 %v1950
        %2002 = vmatpush.bf16.msra.mxu0 %v1947
        %2003 = vmatmul.bf16.gmra.mxu0 %v1834
        %v2004 = vpop.f32.mrf.mxu0
        %v2005 = vadd.f32 %v459, %v2004
        %v2006 = vpop.f32.mrf.mxu0
        %2007 = vdwg.mxu0
        %2008 = vmatpush.bf16.msra.mxu0 %v1969
        %2009 = vmatpush.bf16.msra.mxu0 %v1966
        %2010 = vmatpush.bf16.msra.mxu0 %v1963
        %2011 = vmatpush.bf16.msra.mxu0 %v1960
        %2012 = vmatpush.bf16.msra.mxu0 %v1957
        %2013 = vmatpush.bf16.msra.mxu0 %v1954
        %2014 = vmatpush.bf16.msra.mxu0 %v1951
        %2015 = vmatpush.bf16.msra.mxu0 %v1948
        %2016 = vmatmul.bf16.gmra.mxu0 %v1834
        %v2017 = vpop.f32.mrf.mxu0
        %v2018 = vadd.f32 %v460, %v2017
        %v2019 = vpop.f32.mrf.mxu0
        %2020 = vdwg.mxu0
        %2021 = vmatpush.bf16.msra.mxu0 %v1970
        %2022 = vmatpush.bf16.msra.mxu0 %v1967
        %2023 = vmatpush.bf16.msra.mxu0 %v1964
        %2024 = vmatpush.bf16.msra.mxu0 %v1961
        %2025 = vmatpush.bf16.msra.mxu0 %v1958
        %2026 = vmatpush.bf16.msra.mxu0 %v1955
        %2027 = vmatpush.bf16.msra.mxu0 %v1952
        %2028 = vmatpush.bf16.msra.mxu0 %v1949
        %2029 = vmatmul.bf16.gmra.mxu0 %v1834
        %v2030 = vpop.f32.mrf.mxu0
        %v2031 = vadd.f32 %v461, %v2030
        %v2032 = vpop.f32.mrf.mxu0
        %2033 = vdwg.mxu0
        %v2034 = vadd.f32 %v1833, %v2005
        %v2035 = vxor.u32 %v2034, 2147483648
        %v2036 = vmul.f32 %v2035, 1.442695
        %v2037 = vpow.pop %v2036
        %v2038 = vadd.f32 %v2037, 1.0
        %v2039 = vrcp.pop %v2038
        %v2040 = vmul.f32 %v2038, %v2039
        %v2041 = vsub.f32 1.0, %v2040
        %v2042 = vmul.f32 %v2039, %v2041
        %v2043 = vadd.f32 %v2039, %v2042
        %vm2044 = vweird.f32 %v2038
        %vm2045 = vweird.f32 %v2039
        %vm2046 = vmor %vm2044, %vm2045
        %v2047 = vsel %vm2046, %v2039, %v2043
        %v2048 = vand.u32 2147483647, %v2038
        %vm2049 = vcmp.eq.f32.partialorder %v2048, 8.507059e+37
        %v2050 = vand.u32 %v2038, 2147483648
        %v2051 = vor.u32 1.1754944e-38, %v2050
        %v2052 = vsel %vm2049, %v2051, %v2047
        %v2053 = vmul.f32 1.0, %v2052
        %v2055 = vrot.slane %v1833, 1
        %v2057 = vadd.f32 %v2055, %v2018
        %v2058 = vxor.u32 %v2057, 2147483648
        %v2059 = vmul.f32 %v2058, 1.442695
        %v2060 = vpow.pop %v2059
        %v2061 = vadd.f32 %v2060, 1.0
        %v2062 = vrcp.pop %v2061
        %v2063 = vmul.f32 %v2061, %v2062
        %v2064 = vsub.f32 1.0, %v2063
        %v2065 = vmul.f32 %v2062, %v2064
        %v2066 = vadd.f32 %v2062, %v2065
        %vm2067 = vweird.f32 %v2061
        %vm2068 = vweird.f32 %v2062
        %vm2069 = vmor %vm2067, %vm2068
        %v2070 = vsel %vm2069, %v2062, %v2066
        %v2071 = vand.u32 2147483647, %v2061
        %vm2072 = vcmp.eq.f32.partialorder %v2071, 8.507059e+37
        %v2073 = vand.u32 %v2061, 2147483648
        %v2074 = vor.u32 1.1754944e-38, %v2073
        %v2075 = vsel %vm2072, %v2074, %v2070
        %v2076 = vmul.f32 1.0, %v2075
        %v2077 = vmul.f32 %v2053, %v2031
        %v2078 = vrot.slane %v1833, 2
        %v2080 = vadd.f32 %v2078, %v2077
        %v2081 = vtanh.pop %v2080
        %v2082 = vsub.f32 1.0, %v2076
        %v2083 = vmul.f32 %v2082, %v2081
        %v2084 = vmul.f32 %v2076, %v1830
        %v2085 = vadd.f32 %v2083, %v2084
        %2086 = vst [vmem:[%s285 + $0x6] sm:$0x1] %v2085
        %s2087 = scalar_lea.vmem %s245, 7 [#allocation2]
        %v2088 = vld [vmem:[%s2087] ss:$8 sm:$0x7]
        %v2089 = vpack.c.bf16 %v2085, %v2085
        %v2090 = vld [vmem:[#allocation7] sm:$0xff]
        %v2091 = vld [vmem:[#allocation7 + $0x8] sm:$0xf]
        %v2092 = vld [vmem:[#allocation7 + $0xc] sm:$0xff]
        %v2093 = vld [vmem:[#allocation7 + $0x14] sm:$0xf]
        %v2094 = vld [vmem:[#allocation7 + $0x18] sm:$0xff]
        %v2095 = vld [vmem:[#allocation7 + $0x20] sm:$0xf]
        %v2096 = vld [vmem:[#allocation7 + $0x24] sm:$0xff]
        %v2097 = vld [vmem:[#allocation7 + $0x2c] sm:$0xf]
        %v2098 = vld [vmem:[#allocation7 + $0x30] sm:$0xff]
        %v2099 = vld [vmem:[#allocation7 + $0x38] sm:$0xf]
        %v2100 = vld [vmem:[#allocation7 + $0x3c] sm:$0xff]
        %v2101 = vld [vmem:[#allocation7 + $0x44] sm:$0xf]
        %v2102 = vld [vmem:[#allocation7 + $0x48] sm:$0xff]
        %v2103 = vld [vmem:[#allocation7 + $0x50] sm:$0xf]
        %v2104 = vld [vmem:[#allocation7 + $0x54] sm:$0xff]
        %v2105 = vld [vmem:[#allocation7 + $0x5c] sm:$0xf]
        %v2106 = vld [vmem:[#allocation7 + $0x60] sm:$0xff]
        %v2107 = vld [vmem:[#allocation7 + $0x68] sm:$0xf]
        %v2108 = vld [vmem:[#allocation7 + $0x6c] sm:$0xff]
        %v2109 = vld [vmem:[#allocation7 + $0x74] sm:$0xf]
        %v2110 = vld [vmem:[#allocation7 + $0x78] sm:$0xff]
        %v2111 = vld [vmem:[#allocation7 + $0x80] sm:$0xf]
        %v2112 = vld [vmem:[#allocation7 + $0x84] sm:$0xff]
        %v2113 = vld [vmem:[#allocation7 + $0x8c] sm:$0xf]
        %v2114 = vld [vmem:[#allocation7 + $0x90] sm:$0xff]
        %v2115 = vld [vmem:[#allocation7 + $0x98] sm:$0xf]
        %v2116 = vld [vmem:[#allocation7 + $0x9c] sm:$0xff]
        %v2117 = vld [vmem:[#allocation7 + $0xa4] sm:$0xf]
        %v2118 = vld [vmem:[#allocation7 + $0xa8] sm:$0xff]
        %v2119 = vld [vmem:[#allocation7 + $0xb0] sm:$0xf]
        %v2120 = vld [vmem:[#allocation7 + $0xb4] sm:$0xff]
        %v2121 = vld [vmem:[#allocation7 + $0xbc] sm:$0xf]
        %v2154 = vunpack.c.l.b16 %v2090
        %v2155 = vunpack.c.h.b16 %v2090
        %v2156 = vunpack.c.l.b16 %v2091
        %v2157 = vunpack.c.l.b16 %v2092
        %v2158 = vunpack.c.h.b16 %v2092
        %v2159 = vunpack.c.l.b16 %v2093
        %v2160 = vunpack.c.l.b16 %v2094
        %v2161 = vunpack.c.h.b16 %v2094
        %v2162 = vunpack.c.l.b16 %v2095
        %v2163 = vunpack.c.l.b16 %v2096
        %v2164 = vunpack.c.h.b16 %v2096
        %v2165 = vunpack.c.l.b16 %v2097
        %v2166 = vunpack.c.l.b16 %v2098
        %v2167 = vunpack.c.h.b16 %v2098
        %v2168 = vunpack.c.l.b16 %v2099
        %v2169 = vunpack.c.l.b16 %v2100
        %v2170 = vunpack.c.h.b16 %v2100
        %v2171 = vunpack.c.l.b16 %v2101
        %v2172 = vunpack.c.l.b16 %v2102
        %v2173 = vunpack.c.h.b16 %v2102
        %v2174 = vunpack.c.l.b16 %v2103
        %v2175 = vunpack.c.l.b16 %v2104
        %v2176 = vunpack.c.h.b16 %v2104
        %v2177 = vunpack.c.l.b16 %v2105
        %v2178 = vunpack.c.l.b16 %v2106
        %v2179 = vunpack.c.h.b16 %v2106
        %v2180 = vunpack.c.l.b16 %v2107
        %v2181 = vunpack.c.l.b16 %v2108
        %v2182 = vunpack.c.h.b16 %v2108
        %v2183 = vunpack.c.l.b16 %v2109
        %v2184 = vunpack.c.l.b16 %v2110
        %v2185 = vunpack.c.h.b16 %v2110
        %v2186 = vunpack.c.l.b16 %v2111
        %v2187 = vunpack.c.l.b16 %v2112
        %v2188 = vunpack.c.h.b16 %v2112
        %v2189 = vunpack.c.l.b16 %v2113
        %v2190 = vunpack.c.l.b16 %v2114
        %v2191 = vunpack.c.h.b16 %v2114
        %v2192 = vunpack.c.l.b16 %v2115
        %v2193 = vunpack.c.l.b16 %v2116
        %v2194 = vunpack.c.h.b16 %v2116
        %v2195 = vunpack.c.l.b16 %v2117
        %v2196 = vunpack.c.l.b16 %v2118
        %v2197 = vunpack.c.h.b16 %v2118
        %v2198 = vunpack.c.l.b16 %v2119
        %v2199 = vunpack.c.l.b16 %v2120
        %v2200 = vunpack.c.h.b16 %v2120
        %v2201 = vunpack.c.l.b16 %v2121
        %v2202 = vpack.c.b16 %v2157, %v2154
        %v2203 = vpack.c.b16 %v2158, %v2155
        %v2204 = vpack.c.b16 %v2159, %v2156
        %v2205 = vpack.c.b16 %v2163, %v2160
        %v2206 = vpack.c.b16 %v2164, %v2161
        %v2207 = vpack.c.b16 %v2165, %v2162
        %v2208 = vpack.c.b16 %v2169, %v2166
        %v2209 = vpack.c.b16 %v2170, %v2167
        %v2210 = vpack.c.b16 %v2171, %v2168
        %v2211 = vpack.c.b16 %v2175, %v2172
        %v2212 = vpack.c.b16 %v2176, %v2173
        %v2213 = vpack.c.b16 %v2177, %v2174
        %v2214 = vpack.c.b16 %v2181, %v2178
        %v2215 = vpack.c.b16 %v2182, %v2179
        %v2216 = vpack.c.b16 %v2183, %v2180
        %v2217 = vpack.c.b16 %v2187, %v2184
        %v2218 = vpack.c.b16 %v2188, %v2185
        %v2219 = vpack.c.b16 %v2189, %v2186
        %v2220 = vpack.c.b16 %v2193, %v2190
        %v2221 = vpack.c.b16 %v2194, %v2191
        %v2222 = vpack.c.b16 %v2195, %v2192
        %v2223 = vpack.c.b16 %v2199, %v2196
        %v2224 = vpack.c.b16 %v2200, %v2197
        %v2225 = vpack.c.b16 %v2201, %v2198
        %2250 = vmatpush.bf16.msra.mxu0 %v2223
        %2251 = vmatpush.bf16.msra.mxu0 %v2220
        %2252 = vmatpush.bf16.msra.mxu0 %v2217
        %2253 = vmatpush.bf16.msra.mxu0 %v2214
        %2254 = vmatpush.bf16.msra.mxu0 %v2211
        %2255 = vmatpush.bf16.msra.mxu0 %v2208
        %2256 = vmatpush.bf16.msra.mxu0 %v2205
        %2257 = vmatpush.bf16.msra.mxu0 %v2202
        %2258 = vmatmul.bf16.gmra.mxu0 %v2089
        %v2259 = vpop.f32.mrf.mxu0
        %v2260 = vadd.f32 %v459, %v2259
        %v2261 = vpop.f32.mrf.mxu0
        %2262 = vdwg.mxu0
        %2263 = vmatpush.bf16.msra.mxu0 %v2224
        %2264 = vmatpush.bf16.msra.mxu0 %v2221
        %2265 = vmatpush.bf16.msra.mxu0 %v2218
        %2266 = vmatpush.bf16.msra.mxu0 %v2215
        %2267 = vmatpush.bf16.msra.mxu0 %v2212
        %2268 = vmatpush.bf16.msra.mxu0 %v2209
        %2269 = vmatpush.bf16.msra.mxu0 %v2206
        %2270 = vmatpush.bf16.msra.mxu0 %v2203
        %2271 = vmatmul.bf16.gmra.mxu0 %v2089
        %v2272 = vpop.f32.mrf.mxu0
        %v2273 = vadd.f32 %v460, %v2272
        %v2274 = vpop.f32.mrf.mxu0
        %2275 = vdwg.mxu0
        %2276 = vmatpush.bf16.msra.mxu0 %v2225
        %2277 = vmatpush.bf16.msra.mxu0 %v2222
        %2278 = vmatpush.bf16.msra.mxu0 %v2219
        %2279 = vmatpush.bf16.msra.mxu0 %v2216
        %2280 = vmatpush.bf16.msra.mxu0 %v2213
        %2281 = vmatpush.bf16.msra.mxu0 %v2210
        %2282 = vmatpush.bf16.msra.mxu0 %v2207
        %2283 = vmatpush.bf16.msra.mxu0 %v2204
        %2284 = vmatmul.bf16.gmra.mxu0 %v2089
        %v2285 = vpop.f32.mrf.mxu0
        %v2286 = vadd.f32 %v461, %v2285
        %v2287 = vpop.f32.mrf.mxu0
        %2288 = vdwg.mxu0
        %v2289 = vadd.f32 %v2088, %v2260
        %v2290 = vxor.u32 %v2289, 2147483648
        %v2291 = vmul.f32 %v2290, 1.442695
        %v2292 = vpow.pop %v2291
        %v2293 = vadd.f32 %v2292, 1.0
        %v2294 = vrcp.pop %v2293
        %v2295 = vmul.f32 %v2293, %v2294
        %v2296 = vsub.f32 1.0, %v2295
        %v2297 = vmul.f32 %v2294, %v2296
        %v2298 = vadd.f32 %v2294, %v2297
        %vm2299 = vweird.f32 %v2293
        %vm2300 = vweird.f32 %v2294
        %vm2301 = vmor %vm2299, %vm2300
        %v2302 = vsel %vm2301, %v2294, %v2298
        %v2303 = vand.u32 2147483647, %v2293
        %vm2304 = vcmp.eq.f32.partialorder %v2303, 8.507059e+37
        %v2305 = vand.u32 %v2293, 2147483648
        %v2306 = vor.u32 1.1754944e-38, %v2305
        %v2307 = vsel %vm2304, %v2306, %v2302
        %v2308 = vmul.f32 1.0, %v2307
        %v2310 = vrot.slane %v2088, 1
        %v2312 = vadd.f32 %v2310, %v2273
        %v2313 = vxor.u32 %v2312, 2147483648
        %v2314 = vmul.f32 %v2313, 1.442695
        %v2315 = vpow.pop %v2314
        %v2316 = vadd.f32 %v2315, 1.0
        %v2317 = vrcp.pop %v2316
        %v2318 = vmul.f32 %v2316, %v2317
        %v2319 = vsub.f32 1.0, %v2318
        %v2320 = vmul.f32 %v2317, %v2319
        %v2321 = vadd.f32 %v2317, %v2320
        %vm2322 = vweird.f32 %v2316
        %vm2323 = vweird.f32 %v2317
        %vm2324 = vmor %vm2322, %vm2323
        %v2325 = vsel %vm2324, %v2317, %v2321
        %v2326 = vand.u32 2147483647, %v2316
        %vm2327 = vcmp.eq.f32.partialorder %v2326, 8.507059e+37
        %v2328 = vand.u32 %v2316, 2147483648
        %v2329 = vor.u32 1.1754944e-38, %v2328
        %v2330 = vsel %vm2327, %v2329, %v2325
        %v2331 = vmul.f32 1.0, %v2330
        %v2332 = vmul.f32 %v2308, %v2286
        %v2333 = vrot.slane %v2088, 2
        %v2335 = vadd.f32 %v2333, %v2332
        %v2336 = vtanh.pop %v2335
        %v2337 = vsub.f32 1.0, %v2331
        %v2338 = vmul.f32 %v2337, %v2336
        %v2339 = vmul.f32 %v2331, %v2085
        %v2340 = vadd.f32 %v2338, %v2339
        %2341 = vst [vmem:[%s285 + $0x7] sm:$0x1] %v2340
        %2342 = vst [vmem:[#allocation11] sm:$0x1] %v2340
        %s2343 = sand.u32 %s123, 1
        %s2344 = scalar_lea.sflag [#allocation4], %s2343
        %s2345 = sand.u32 %s123, 1
        %s2346 = smul.addr %s2345, 8
        %s2347 = scalar_lea.vmem [#allocation10], %s2346
        // Predicated region
        $region57: #{tpu_custom_call.1} parent=35 // pred_check
          %p2348 = pneg %p133
        $region58: #{tpu_custom_call.1} parent=35 // pred_check_branch
          %2350 = sbr.rel (%p2348) target = $region60
        $region59: #{tpu_custom_call.1} parent=35 // pred_region
          %2352 = vsyncadd %s2344, 0
          %s2353 = smul.addr %s26, 8
          %s2354 = scalar_lea.hbm %s4, %s2353
          %s2356 = sshll.u32 %s2347, 4
          %s2357 = int_to_ptr.vmem [resolvable:$true] %s2356
          %s2358 = sshll.u32 %s2354, 4
          %s2359 = int_to_ptr.hbm [resolvable:$true] %s2358
          %2361 = dma.vmem_to_hbm [thread:$0]  %s2357, 128, %s2359, %s2344
        $region60: #{tpu_custom_call.1} parent=35 // pred_fallthru
          _
        // Predicated region
        $region61: #{tpu_custom_call.1} parent=35 // pred_check
          %p2362 = pneg %p154
        $region62: #{tpu_custom_call.1} parent=35 // pred_check_branch
          %2364 = sbr.rel (%p2362) target = $region64
        $region63: #{tpu_custom_call.1} parent=35 // pred_region
          %2366 = vsyncadd [#allocation12], 0
          %s2368 = sshll.u32 [#allocation11], 4
          %s2369 = int_to_ptr.vmem [resolvable:$true] %s2368
          %s2370 = sshll.u32 %s5, 4
          %s2371 = int_to_ptr.hbm [resolvable:$true] %s2370
          %2373 = dma.vmem_to_hbm [thread:$0]  %s2369, 16, %s2371, [#allocation12]
        $region64: #{tpu_custom_call.1} parent=35 // pred_fallthru
          _
        // Predicated region
        $region65: #{tpu_custom_call.1} parent=35 // pred_check
          %p2374 = pneg %p154
        $region66: #{tpu_custom_call.1} parent=35 // pred_check_branch
          %2376 = sbr.rel (%p2374) target = $region68
        $region67: #{tpu_custom_call.1} parent=35 // pred_region
          %2378 = dma.done [#allocation12], 16
        $region68: #{tpu_custom_call.1} parent=35 // pred_fallthru
          _
      $region36: #{tpu_custom_call.1} parent=5 // pred_fallthru
        _
      %p2379 = scmp.le.s32.totalorder 2, %s21
      // Predicated region
      $region69: #{tpu_custom_call.1} parent=5 // pred_check
        %p2380 = pneg %p2379
      $region70: #{tpu_custom_call.1} parent=5 // pred_check_branch
        %2382 = sbr.rel (%p2380) target = $region72
      $region71: #{tpu_custom_call.1} parent=5 // pred_region
        %s2383 = ssub.s32 %s21, 2
        // Predicated region
        $region73: #{tpu_custom_call.1} parent=71 // pred_check
          %p2384 = pneg %p139
        $region74: #{tpu_custom_call.1} parent=71 // pred_check_branch
          %2386 = sbr.rel (%p2384) target = $region76
        $region75: #{tpu_custom_call.1} parent=71 // pred_region
          %s2387 = sand.u32 %s124, 1
          %s2388 = scalar_lea.sflag [#allocation4], %s2387
          %s2389 = sand.u32 %s124, 1
          %s2390 = smul.addr %s2389, 8
          %s2391 = scalar_lea.vmem [#allocation10], %s2390
          %2393 = dma.done %s2388, 128
        $region76: #{tpu_custom_call.1} parent=71 // pred_fallthru
          _
      $region72: #{tpu_custom_call.1} parent=5 // pred_fallthru
        _
    $region6: #{tpu_custom_call.1} parent=1 // loop_footer
      %s25 = sadd.s32 1, %s21
    $region7: #{tpu_custom_call.1} parent=1 // loop_footer_branch
      %20 = sbr.rel target = $region3
    $region8: #{tpu_custom_call.1} parent=1 // loop_exit
      _
    %2394 = vsyncpa [#allocation3], 1
    %s2395 = scalar_lea.sflag [#allocation3], 1
    %2396 = vsyncpa %s2395, 1
    %2397 = vsyncpa [#allocation6], 1
    %2398 = vsyncpa [#allocation9], 1
    %2399 = vsyncpa [#allocation4], 1
    %s2400 = scalar_lea.sflag [#allocation4], 1
    %2401 = vsyncpa %s2400, 1
    %2402 = vsyncpa [#allocation12], 1

</llo_original>
